<compile_context>
chip_gen: v6e
topology: v6e:2x2x1
jax: 0.10.0
libtpu: 0.0.40
codegen_flags: <defaults>
</compile_context>

<pallas_src>
import jax
import jax.numpy as jnp
from jax.experimental import pallas as pl
from jax.experimental.pallas import tpu as pltpu

CONTEXT_SIZE = 2
EMBEDDING_SIZE = 10
HIDDEN = 128
N_CTX = 2 * CONTEXT_SIZE          # 4 context tokens per example
MIN_BATCH_TILE = 128              # sublane/lane friendly lower bound
MAX_BATCH_TILE = 1024             # ~0.5 MiB output tile; comfortably fits v7x's 64 MiB VMEM

raw_text = "When forty winters shall besiege thy brow,\nAnd dig deep trenches in thy beauty's field,\nThy youth's proud livery so gazed on now,\nWill be a totter'd weed of small worth held:\nThen being asked, where all thy beauty lies,\nWhere all the treasure of thy lusty days;\nTo say, within thine own deep sunken eyes,\nWere an all-eating shame, and thriftless praise.\nHow much more praise deserv'd thy beauty's use,\nIf thou couldst answer 'This fair child of mine\nShall sum my count, and make my old excuse,'\nProving his beauty by succession thine!\nThis were to be new made when thou art old,\nAnd see thy blood warm when thou feel'st it cold.".split()

vocab = sorted(set(raw_text))          # sorted for deterministic id assignment
vocab_size = len(vocab)
word_to_ix = {w: i for i, w in enumerate(vocab)}

_NEG = -1e30                            # effectively -inf for padded vocab lanes


def cbow_kernel(idx_ref, table_ref, w2_ref, b2_ref, out_ref):
    """Per batch tile: one-hot gather -> relu -> accumulated layer-2 matmuls -> log_softmax.

    table_ref rows already contain embed @ w1 + b1 (b1 folded in the wrapper)."""
    tb, n_ctx = idx_ref.shape
    vr, hidden = table_ref.shape                # (padded vocab rows, HIDDEN)

    ids = idx_ref[...]                          # (TB, 4) int32
    table = table_ref[...]                      # (VR, HIDDEN)
    lane = jax.lax.broadcasted_iota(jnp.int32, (tb, vr), 1)

    logits = None
    for j in range(n_ctx):                      # unrolled: 4 context positions
        onehot = (ids[:, j:j + 1] == lane).astype(jnp.float32)            # (TB, VR)
        g = jnp.dot(onehot, table, preferred_element_type=jnp.float32)    # == table[ids[:, j]]
        hj = jnp.maximum(g, 0.0)                                          # ReLU(linear1)
        contrib = jnp.dot(hj, w2_ref[j * hidden:(j + 1) * hidden, :],     # (TB, VP)
                          preferred_element_type=jnp.float32)
        logits = contrib if logits is None else logits + contrib
    logits = logits + b2_ref[...]               # padded lanes carry -1e30

    # log_softmax over the vocab axis (padded lanes vanish in the exp-sum).
    m = jnp.max(logits, axis=1, keepdims=True)
    s = logits - m
    lse = jnp.log(jnp.sum(jnp.exp(s), axis=1, keepdims=True))
    out_ref[...] = s - lse


def _choose_batch_tile(B):
    """Biggest multiple-of-128 tile <= MAX_BATCH_TILE that still leaves >= 2 grid tiles
    (when B allows), so the 'parallel' axis can be split across v7x's two TensorCores."""
    if B <= MIN_BATCH_TILE:
        return MIN_BATCH_TILE
    half = pl.cdiv(B, 2)
    tile = pl.cdiv(half, MIN_BATCH_TILE) * MIN_BATCH_TILE
    return min(MAX_BATCH_TILE, tile)


def cbow_forward(idx, embed, w1, b1, w2, b2, *, batch_tile=None):
    """Batched CBOW forward. idx: (B, 4) int32. Returns (B, vocab_size) log-probabilities."""
    B = idx.shape[0]
    V = w2.shape[1]
    VP = ((V + 127) // 128) * 128               # lane-padded vocab (logits / output / w2 cols)
    VR = VP                                     # row-padded vocab (gather table rows)

    if batch_tile is None:
        batch_tile = _choose_batch_tile(B)

    # Fold linear1 weight AND bias through the embedding (exact for inference) and pad
    # everything to lane-dense shapes.
    # TODO(synk): folding w1/b1 into the table is valid for inference only, not training.
    table = jnp.dot(embed, w1) + b1                                         # (V, HIDDEN)
    table_p = jnp.zeros((VR, HIDDEN), jnp.float32).at[:V].set(table)
    w2_p = jnp.zeros((N_CTX * HIDDEN, VP), jnp.float32).at[:, :V].set(w2)
    b2_p = jnp.full((1, VP), _NEG, jnp.float32).at[:, :V].set(b2)

    # Pad the batch up to a multiple of the tile.
    num_tiles = pl.cdiv(B, batch_tile)
    Bp = num_tiles * batch_tile
    if Bp != B:
        idx = jnp.pad(idx, ((0, Bp - B), (0, 0)))

    out = pl.pallas_call(
        cbow_kernel,
        out_shape=jax.ShapeDtypeStruct((Bp, VP), jnp.float32),
        grid=(num_tiles,),
        in_specs=[
            pl.BlockSpec((batch_tile, N_CTX), lambda i: (i, 0)),        # token indices tile
            pl.BlockSpec((VR, HIDDEN), lambda i: (0, 0)),               # embed@w1 + b1 (resident)
            pl.BlockSpec((N_CTX * HIDDEN, VP), lambda i: (0, 0)),       # w2 (padded, resident)
            pl.BlockSpec((1, VP), lambda i: (0, 0)),                    # b2 (pad lanes = -1e30)
        ],
        out_specs=pl.BlockSpec((batch_tile, VP), lambda i: (i, 0)),
        compiler_params=pltpu.CompilerParams(dimension_semantics=("parallel",)),
    )(idx, table_p, w2_p, b2_p)

    return out[:B, :V]


def cbow_reference(idx, embed, w1, b1, w2, b2):
    em = embed[idx]                                             # (B, 4, E)
    z1 = jax.nn.relu(jnp.einsum("bce,eh->bch", em, w1) + b1)    # (B, 4, 128)
    h = z1.reshape(z1.shape[0], -1)                             # (B, 512) == view(1, -1) per example
    y2 = h @ w2 + b2                                            # (B, V)
    return jax.nn.log_softmax(y2, axis=1)


if __name__ == "__main__":
    key = jax.random.PRNGKey(0)
    k_emb, k_w1, k_b1, k_w2, k_b2 = jax.random.split(key, 5)

    # Deterministic parameter init (shapes from the module's __init__).
    embed = jax.random.normal(k_emb, (vocab_size, EMBEDDING_SIZE), jnp.float32)
    w1 = jax.random.uniform(k_w1, (EMBEDDING_SIZE, HIDDEN), jnp.float32, -0.3, 0.3)
    b1 = jax.random.uniform(k_b1, (1, HIDDEN), jnp.float32, -0.3, 0.3)
    w2 = jax.random.uniform(k_w2, (HIDDEN * N_CTX, vocab_size), jnp.float32, -0.05, 0.05)
    b2 = jax.random.uniform(k_b2, (1, vocab_size), jnp.float32, -0.05, 0.05)

    # Build every 2-left / 2-right CBOW context window from the text and tile to B examples.
    contexts = []
    for i in range(CONTEXT_SIZE, len(raw_text) - CONTEXT_SIZE):
        ctx = [raw_text[i - 2], raw_text[i - 1], raw_text[i + 1], raw_text[i + 2]]
        contexts.append([word_to_ix[w] for w in ctx])
    B = 256
    reps = (B + len(contexts) - 1) // len(contexts)
    idx = jnp.array((contexts * reps)[:B], dtype=jnp.int32)     # (B, 4)

    out = jax.block_until_ready(cbow_forward(idx, embed, w1, b1, w2, b2))
    ref = cbow_reference(idx, embed, w1, b1, w2, b2)

    assert out.shape == (B, vocab_size)
    assert jnp.allclose(out, ref, atol=1e-4, rtol=1e-4), "mismatch vs pure-JAX reference"
    print("KERNEL_OK")
</pallas_src>

<mosaic_0001>
module attributes {stable_mosaic.version = 11 : i64} {
  func.func @cbow_kernel(%arg0: i32, %arg1: memref<128x4xi32, #tpu.memory_space<vmem>>, %arg2: memref<128x128xf32, #tpu.memory_space<vmem>>, %arg3: memref<512x128xf32, #tpu.memory_space<vmem>>, %arg4: memref<1x128xf32, #tpu.memory_space<vmem>>, %arg5: memref<128x128xf32, #tpu.memory_space<vmem>>) attributes {dimension_semantics = [#tpu.dimension_semantics<parallel>], iteration_bounds = array<i64: 2>, scalar_prefetch = 0 : i64, scratch_operands = 0 : i64, tpu.core_type = #tpu.core_type<tc>, window_params = [{transform_indices = @transform_0, window_bounds = array<i64: 128, 4>}, {pipeline_mode = #tpu.pipeline_mode<synchronous>, transform_indices = @transform_1, window_bounds = array<i64: 128, 128>}, {pipeline_mode = #tpu.pipeline_mode<synchronous>, transform_indices = @transform_2, window_bounds = array<i64: 512, 128>}, {pipeline_mode = #tpu.pipeline_mode<synchronous>, transform_indices = @transform_3, window_bounds = array<i64: 1, 128>}, {transform_indices = @transform_4, window_bounds = array<i64: 128, 128>}]} {
    %c0 = arith.constant 0 : index
    %c0_0 = arith.constant 0 : index
    %0 = vector.load %arg1[%c0, %c0_0] : memref<128x4xi32, #tpu.memory_space<vmem>>, vector<128x4xi32>
    %c0_1 = arith.constant 0 : index
    %c0_2 = arith.constant 0 : index
    %1 = vector.load %arg2[%c0_1, %c0_2] : memref<128x128xf32, #tpu.memory_space<vmem>>, vector<128x128xf32>
    %2 = tpu.iota {dimensions = array<i32: 1>} : vector<128x128xi32>
    %3 = vector.extract_strided_slice %0 {offsets = [0, 0], sizes = [128, 1], strides = [1, 1]} : vector<128x4xi32> to vector<128x1xi32>
    %4 = vector.broadcast %3 : vector<128x1xi32> to vector<128x128xi32>
    %5 = arith.cmpi eq, %4, %2 : vector<128x128xi32>
    %6 = arith.extui %5 : vector<128x128xi1> to vector<128x128xi32>
    %7 = arith.sitofp %6 : vector<128x128xi32> to vector<128x128xf32>
    %cst = arith.constant dense<0.000000e+00> : vector<128x128xf32>
    %8 = tpu.matmul %7, %1, %cst {dimension_numbers = #tpu.dot_dimension_numbers<[1], [0], [0], [1], [0, 0, 1, 1], [], []>} : vector<128x128xf32>, vector<128x128xf32>, vector<128x128xf32> -> vector<128x128xf32>
    %cst_3 = arith.constant 0.000000e+00 : f32
    %9 = vector.broadcast %cst_3 : f32 to vector<128x128xf32>
    %10 = arith.maximumf %8, %9 : vector<128x128xf32>
    %c0_4 = arith.constant 0 : index
    %c0_5 = arith.constant 0 : index
    %11 = vector.load %arg3[%c0_4, %c0_5] : memref<512x128xf32, #tpu.memory_space<vmem>>, vector<128x128xf32>
    %cst_6 = arith.constant dense<0.000000e+00> : vector<128x128xf32>
    %12 = tpu.matmul %10, %11, %cst_6 {dimension_numbers = #tpu.dot_dimension_numbers<[1], [0], [0], [1], [0, 0, 1, 1], [], []>} : vector<128x128xf32>, vector<128x128xf32>, vector<128x128xf32> -> vector<128x128xf32>
    %13 = vector.extract_strided_slice %0 {offsets = [0, 1], sizes = [128, 1], strides = [1, 1]} : vector<128x4xi32> to vector<128x1xi32>
    %14 = vector.broadcast %13 : vector<128x1xi32> to vector<128x128xi32>
    %15 = arith.cmpi eq, %14, %2 : vector<128x128xi32>
    %16 = arith.extui %15 : vector<128x128xi1> to vector<128x128xi32>
    %17 = arith.sitofp %16 : vector<128x128xi32> to vector<128x128xf32>
    %cst_7 = arith.constant dense<0.000000e+00> : vector<128x128xf32>
    %18 = tpu.matmul %17, %1, %cst_7 {dimension_numbers = #tpu.dot_dimension_numbers<[1], [0], [0], [1], [0, 0, 1, 1], [], []>} : vector<128x128xf32>, vector<128x128xf32>, vector<128x128xf32> -> vector<128x128xf32>
    %cst_8 = arith.constant 0.000000e+00 : f32
    %19 = vector.broadcast %cst_8 : f32 to vector<128x128xf32>
    %20 = arith.maximumf %18, %19 : vector<128x128xf32>
    %c128 = arith.constant 128 : index
    %c0_9 = arith.constant 0 : index
    %21 = vector.load %arg3[%c128, %c0_9] : memref<512x128xf32, #tpu.memory_space<vmem>>, vector<128x128xf32>
    %cst_10 = arith.constant dense<0.000000e+00> : vector<128x128xf32>
    %22 = tpu.matmul %20, %21, %cst_10 {dimension_numbers = #tpu.dot_dimension_numbers<[1], [0], [0], [1], [0, 0, 1, 1], [], []>} : vector<128x128xf32>, vector<128x128xf32>, vector<128x128xf32> -> vector<128x128xf32>
    %23 = arith.addf %12, %22 : vector<128x128xf32>
    %24 = vector.extract_strided_slice %0 {offsets = [0, 2], sizes = [128, 1], strides = [1, 1]} : vector<128x4xi32> to vector<128x1xi32>
    %25 = vector.broadcast %24 : vector<128x1xi32> to vector<128x128xi32>
    %26 = arith.cmpi eq, %25, %2 : vector<128x128xi32>
    %27 = arith.extui %26 : vector<128x128xi1> to vector<128x128xi32>
    %28 = arith.sitofp %27 : vector<128x128xi32> to vector<128x128xf32>
    %cst_11 = arith.constant dense<0.000000e+00> : vector<128x128xf32>
    %29 = tpu.matmul %28, %1, %cst_11 {dimension_numbers = #tpu.dot_dimension_numbers<[1], [0], [0], [1], [0, 0, 1, 1], [], []>} : vector<128x128xf32>, vector<128x128xf32>, vector<128x128xf32> -> vector<128x128xf32>
    %cst_12 = arith.constant 0.000000e+00 : f32
    %30 = vector.broadcast %cst_12 : f32 to vector<128x128xf32>
    %31 = arith.maximumf %29, %30 : vector<128x128xf32>
    %c256 = arith.constant 256 : index
    %c0_13 = arith.constant 0 : index
    %32 = vector.load %arg3[%c256, %c0_13] : memref<512x128xf32, #tpu.memory_space<vmem>>, vector<128x128xf32>
    %cst_14 = arith.constant dense<0.000000e+00> : vector<128x128xf32>
    %33 = tpu.matmul %31, %32, %cst_14 {dimension_numbers = #tpu.dot_dimension_numbers<[1], [0], [0], [1], [0, 0, 1, 1], [], []>} : vector<128x128xf32>, vector<128x128xf32>, vector<128x128xf32> -> vector<128x128xf32>
    %34 = arith.addf %23, %33 : vector<128x128xf32>
    %35 = vector.extract_strided_slice %0 {offsets = [0, 3], sizes = [128, 1], strides = [1, 1]} : vector<128x4xi32> to vector<128x1xi32>
    %36 = vector.broadcast %35 : vector<128x1xi32> to vector<128x128xi32>
    %37 = arith.cmpi eq, %36, %2 : vector<128x128xi32>
    %38 = arith.extui %37 : vector<128x128xi1> to vector<128x128xi32>
    %39 = arith.sitofp %38 : vector<128x128xi32> to vector<128x128xf32>
    %cst_15 = arith.constant dense<0.000000e+00> : vector<128x128xf32>
    %40 = tpu.matmul %39, %1, %cst_15 {dimension_numbers = #tpu.dot_dimension_numbers<[1], [0], [0], [1], [0, 0, 1, 1], [], []>} : vector<128x128xf32>, vector<128x128xf32>, vector<128x128xf32> -> vector<128x128xf32>
    %cst_16 = arith.constant 0.000000e+00 : f32
    %41 = vector.broadcast %cst_16 : f32 to vector<128x128xf32>
    %42 = arith.maximumf %40, %41 : vector<128x128xf32>
    %c384 = arith.constant 384 : index
    %c0_17 = arith.constant 0 : index
    %43 = vector.load %arg3[%c384, %c0_17] : memref<512x128xf32, #tpu.memory_space<vmem>>, vector<128x128xf32>
    %cst_18 = arith.constant dense<0.000000e+00> : vector<128x128xf32>
    %44 = tpu.matmul %42, %43, %cst_18 {dimension_numbers = #tpu.dot_dimension_numbers<[1], [0], [0], [1], [0, 0, 1, 1], [], []>} : vector<128x128xf32>, vector<128x128xf32>, vector<128x128xf32> -> vector<128x128xf32>
    %45 = arith.addf %34, %44 : vector<128x128xf32>
    %c0_19 = arith.constant 0 : index
    %c0_20 = arith.constant 0 : index
    %46 = vector.load %arg4[%c0_19, %c0_20] : memref<1x128xf32, #tpu.memory_space<vmem>>, vector<1x128xf32>
    %47 = vector.broadcast %46 : vector<1x128xf32> to vector<128x128xf32>
    %48 = arith.addf %45, %47 : vector<128x128xf32>
    %cst_21 = arith.constant dense<0xFF800000> : vector<128xf32>
    %49 = vector.multi_reduction <maximumf>, %48, %cst_21 [1] : vector<128x128xf32> to vector<128xf32>
    %50 = vector.shape_cast %49 : vector<128xf32> to vector<128x1xf32>
    %51 = vector.broadcast %50 : vector<128x1xf32> to vector<128x128xf32>
    %52 = arith.subf %48, %51 : vector<128x128xf32>
    %53 = math.exp %52 : vector<128x128xf32>
    %cst_22 = arith.constant dense<0.000000e+00> : vector<128xf32>
    %54 = vector.multi_reduction <add>, %53, %cst_22 [1] : vector<128x128xf32> to vector<128xf32>
    %55 = vector.shape_cast %54 : vector<128xf32> to vector<128x1xf32>
    %56 = math.log %55 : vector<128x1xf32>
    %57 = vector.broadcast %56 : vector<128x1xf32> to vector<128x128xf32>
    %58 = arith.subf %52, %57 : vector<128x128xf32>
    %c0_23 = arith.constant 0 : index
    %c0_24 = arith.constant 0 : index
    %59 = vector.load %arg5[%c0_23, %c0_24] : memref<128x128xf32, #tpu.memory_space<vmem>>, vector<128x128xf32>
    tpu.vector_store %arg5[%c0_23, %c0_24], %58 {strides = array<i32>} : memref<128x128xf32, #tpu.memory_space<vmem>>, vector<128x128xf32>,
    return
  }
  func.func @transform_0(%arg0: i32) -> (i32, i32) {
    %c0_i32 = arith.constant 0 : i32
    %c0_i32_0 = arith.constant 0 : i32
    return %arg0, %c0_i32 : i32, i32
  }
  func.func @transform_1(%arg0: i32) -> (i32, i32) {
    %c0_i32 = arith.constant 0 : i32
    %c0_i32_0 = arith.constant 0 : i32
    %c0_i32_1 = arith.constant 0 : i32
    return %c0_i32, %c0_i32_0 : i32, i32
  }
  func.func @transform_2(%arg0: i32) -> (i32, i32) {
    %c0_i32 = arith.constant 0 : i32
    %c0_i32_0 = arith.constant 0 : i32
    %c0_i32_1 = arith.constant 0 : i32
    return %c0_i32, %c0_i32_0 : i32, i32
  }
  func.func @transform_3(%arg0: i32) -> (i32, i32) {
    %c0_i32 = arith.constant 0 : i32
    %c0_i32_0 = arith.constant 0 : i32
    %c0_i32_1 = arith.constant 0 : i32
    return %c0_i32, %c0_i32_0 : i32, i32
  }
  func.func @transform_4(%arg0: i32) -> (i32, i32) {
    %c0_i32 = arith.constant 0 : i32
    %c0_i32_0 = arith.constant 0 : i32
    return %arg0, %c0_i32 : i32, i32
  }
}

</mosaic_0001>

<llo_original>
// kernel: tpu_custom_call.1
$region0: #{tpu_custom_call.1}
  #allocation0 [shape = 'u32[]', space=smem, size = 0x4, offset = 0x4, fixed_abs, tag = 'smem constant byte address 0x4 - core index']
  #allocation1 [shape = 'u32[144,128]{1,0:T(1,128)}', space=vmem, size = 0x12000, scoped, tag = 'internal scratch']
  %s0 = inlined_call_operand.vmem [shape: s32[256,4], index: 0, kind: input, shape index: {}]
  %s1 = inlined_call_operand.vmem [shape: f32[128,128], index: 1, kind: input, shape index: {}]
  %s2 = inlined_call_operand.hbm [shape: f32[512,128], index: 2, kind: input, shape index: {}]
  %s3 = inlined_call_operand.vmem [shape: f32[1,128], index: 3, kind: input, shape index: {}]
  %s4 = inlined_call_operand.hbm [shape: f32[256,128], index: 4, kind: output, shape index: {}]
  %s5 = sld [smem:[#allocation0]]
  $region53: #{tpu_custom_call.1} parent=0
    _
  %s7 = ssub.s32 1, %s5
  %s8 = scalar_select 0, %s7, %s5
  $region1: #{tpu_custom_call.1} parent=0
    #allocation2 [shape = 'u8[262144]{0}', space=vmem, size = 0x40000, scoped, tag = 'input window, operand 2, single buffered']
    #allocation3 [shape = 's32[2]{0}', space=sflag, size = 0x8, scoped, tag = 'scoped memory for tpu_custom_call.1']
    #allocation4 [shape = 's32[2]{0}', space=sflag, size = 0x8, scoped, tag = 'scoped memory for tpu_custom_call.1']
    #allocation5 [shape = 'u8[131072]{0}', space=vmem, size = 0x20000, scoped, tag = 'output window, operand 0']
    %9 = vsyncpa [#allocation3], 0
    %10 = vsyncpa [#allocation4], 0
    %s11 = scalar_lea.sflag [#allocation4], 1
    %12 = vsyncpa %s11, 0
    loop: start=0, step=1, limit=4
    $region2: #{tpu_custom_call.1} parent=1 // loop_pre_header
      _
    $region3: #{tpu_custom_call.1} parent=1 // loop_header
      %s14 = sphi 0, %s18
      %p15 = scmp.ge.s32.totalorder %s14, 4
      %s24 = sphi 0, %s26
      %s27 = sphi 0, %s24
      %s28 = sphi 0, %s27
      %s44 = sphi 0, %s28
      %s48 = sphi 0, %s48
      %s50 = sphi 0, %s48
      %s51 = sphi 0, %s50
      %s65 = sphi 0, %s51
      %s69 = sphi 0, %s69
      %s71 = sphi 0, %s69
      %s72 = sphi 0, %s71
      %s86 = sphi 0, %s72
      %s90 = sphi 0, %s90
      %s92 = sphi 0, %s90
      %s93 = sphi 0, %s92
      %s107 = sphi 0, %s93
      %s113 = sphi 0, %s115
      %s116 = sphi 0, %s113
      %s117 = sphi 0, %s116
      %s133 = sphi 0, %s117
    $region4: #{tpu_custom_call.1} parent=1 // loop_header_branch
      %17 = sbr.rel (%p15) target = $region8
    $region5: #{tpu_custom_call.1} parent=1 // loop_body
      %s19 = ssub.s32 %s14, 1
      %s20 = ssub.s32 %s14, 2
      %s21 = sadd.s32 %s14, 1
      %s22 = ssub.s32 %s14, %s21
      %p23 = scmp.eq.s32.totalorder %s22, 0
      %s25 = sadd.s32 %s24, 1
      %s26 = scalar_select %p23, %s24, %s25
      %p29 = pneg %p23
      %p30 = scmp.eq.s32.totalorder %s14, 1
      %p31 = por %p29, %p30
      %p32 = scmp.ne.s32.totalorder %s24, %s27
      %p33 = scmp.eq.s32.totalorder %s14, 0
      %p34 = por %p32, %p33
      %p35 = scmp.ne.s32.totalorder %s24, %s27
      %p36 = scmp.eq.s32.totalorder %s19, 1
      %p37 = por %p35, %p36
      %p38 = scmp.ne.s32.totalorder %s27, %s28
      %p39 = scmp.eq.s32.totalorder %s19, 0
      %p40 = por %p38, %p39
      %p41 = scmp.ne.s32.totalorder %s27, %s28
      %p42 = scmp.eq.s32.totalorder %s20, 1
      %p43 = por %p41, %p42
      %p45 = scmp.ne.s32.totalorder %s28, %s44
      %p46 = scmp.eq.s32.totalorder %s20, 0
      %p47 = por %p45, %p46
      %s49 = sadd.s32 %s48, 1
      %p52 = scmp.eq.s32.totalorder %s14, 1
      %p53 = scmp.ne.s32.totalorder %s48, %s50
      %p54 = scmp.eq.s32.totalorder %s14, 0
      %p55 = por %p53, %p54
      %p56 = scmp.ne.s32.totalorder %s48, %s50
      %p57 = scmp.eq.s32.totalorder %s19, 1
      %p58 = por %p56, %p57
      %p59 = scmp.ne.s32.totalorder %s50, %s51
      %p60 = scmp.eq.s32.totalorder %s19, 0
      %p61 = por %p59, %p60
      %p62 = scmp.ne.s32.totalorder %s50, %s51
      %p63 = scmp.eq.s32.totalorder %s20, 1
      %p64 = por %p62, %p63
      %p66 = scmp.ne.s32.totalorder %s51, %s65
      %p67 = scmp.eq.s32.totalorder %s20, 0
      %p68 = por %p66, %p67
      %s70 = sadd.s32 %s69, 1
      %p73 = scmp.eq.s32.totalorder %s14, 1
      %p74 = scmp.ne.s32.totalorder %s69, %s71
      %p75 = scmp.eq.s32.totalorder %s14, 0
      %p76 = por %p74, %p75
      %p77 = scmp.ne.s32.totalorder %s69, %s71
      %p78 = scmp.eq.s32.totalorder %s19, 1
      %p79 = por %p77, %p78
      %p80 = scmp.ne.s32.totalorder %s71, %s72
      %p81 = scmp.eq.s32.totalorder %s19, 0
      %p82 = por %p80, %p81
      %p83 = scmp.ne.s32.totalorder %s71, %s72
      %p84 = scmp.eq.s32.totalorder %s20, 1
      %p85 = por %p83, %p84
      %p87 = scmp.ne.s32.totalorder %s72, %s86
      %p88 = scmp.eq.s32.totalorder %s20, 0
      %p89 = por %p87, %p88
      %s91 = sadd.s32 %s90, 1
      %p94 = scmp.eq.s32.totalorder %s14, 1
      %p95 = scmp.ne.s32.totalorder %s90, %s92
      %p96 = scmp.eq.s32.totalorder %s14, 0
      %p97 = por %p95, %p96
      %p98 = scmp.ne.s32.totalorder %s90, %s92
      %p99 = scmp.eq.s32.totalorder %s19, 1
      %p100 = por %p98, %p99
      %p101 = scmp.ne.s32.totalorder %s92, %s93
      %p102 = scmp.eq.s32.totalorder %s19, 0
      %p103 = por %p101, %p102
      %p104 = scmp.ne.s32.totalorder %s92, %s93
      %p105 = scmp.eq.s32.totalorder %s20, 1
      %p106 = por %p104, %p105
      %p108 = scmp.ne.s32.totalorder %s93, %s107
      %p109 = scmp.eq.s32.totalorder %s20, 0
      %p110 = por %p108, %p109
      %s111 = ssub.s32 %s14, %s21
      %p112 = scmp.eq.s32.totalorder %s111, 0
      %s114 = sadd.s32 %s113, 1
      %s115 = scalar_select %p112, %s113, %s114
      %p118 = pneg %p112
      %p119 = scmp.eq.s32.totalorder %s14, 1
      %p120 = por %p118, %p119
      %p121 = scmp.ne.s32.totalorder %s113, %s116
      %p122 = scmp.eq.s32.totalorder %s14, 0
      %p123 = por %p121, %p122
      %p124 = scmp.ne.s32.totalorder %s113, %s116
      %p125 = scmp.eq.s32.totalorder %s19, 1
      %p126 = por %p124, %p125
      %p127 = scmp.ne.s32.totalorder %s116, %s117
      %p128 = scmp.eq.s32.totalorder %s19, 0
      %p129 = por %p127, %p128
      %p130 = scmp.ne.s32.totalorder %s116, %s117
      %p131 = scmp.eq.s32.totalorder %s20, 1
      %p132 = por %p130, %p131
      %p134 = scmp.ne.s32.totalorder %s117, %s133
      %p135 = scmp.eq.s32.totalorder %s20, 0
      %p136 = por %p134, %p135
      %p137 = scmp.le.s32.totalorder 1, %s14
      %p138 = scmp.lt.s32.totalorder %s14, 3
      %p139 = pnand %p137, %p138
      %p140 = pneg %p139
      // Predicated region
      $region9: #{tpu_custom_call.1} parent=5 // pred_check
        _
      $region10: #{tpu_custom_call.1} parent=5 // pred_check_branch
        %142 = sbr.rel (%p139) target = $region12
      $region11: #{tpu_custom_call.1} parent=5 // pred_region
        %s143 = ssub.s32 %s14, 1
        // Predicated region
        $region13: #{tpu_custom_call.1} parent=11 // pred_check
          %p144 = pneg %p61
        $region14: #{tpu_custom_call.1} parent=11 // pred_check_branch
          %146 = sbr.rel (%p144) target = $region16
        $region15: #{tpu_custom_call.1} parent=11 // pred_region
          _
        $region16: #{tpu_custom_call.1} parent=11 // pred_fallthru
          _
        // Predicated region
        $region17: #{tpu_custom_call.1} parent=11 // pred_check
          %p147 = pneg %p82
        $region18: #{tpu_custom_call.1} parent=11 // pred_check_branch
          %149 = sbr.rel (%p147) target = $region20
        $region19: #{tpu_custom_call.1} parent=11 // pred_region
          %s151 = ssub.s32 8192, 8192
          %152 = vsyncadd [#allocation3], %s151
          %s153 = sshll.u32 [#allocation2], 4
          %s154 = int_to_ptr.vmem [resolvable:$true] %s153
          %159 = dma.hbm_to_vmem [thread:$0]  %s2, 8192, %s154, [#allocation3], 128, 128, 8
        $region20: #{tpu_custom_call.1} parent=11 // pred_fallthru
          _
        // Predicated region
        $region21: #{tpu_custom_call.1} parent=11 // pred_check
          %p160 = pneg %p103
        $region22: #{tpu_custom_call.1} parent=11 // pred_check_branch
          %162 = sbr.rel (%p160) target = $region24
        $region23: #{tpu_custom_call.1} parent=11 // pred_region
          _
        $region24: #{tpu_custom_call.1} parent=11 // pred_fallthru
          _
      $region12: #{tpu_custom_call.1} parent=5 // pred_fallthru
        _
      %p163 = scmp.lt.s32.totalorder %s14, 2
      // Predicated region
      $region25: #{tpu_custom_call.1} parent=5 // pred_check
        %p164 = pneg %p163
      $region26: #{tpu_custom_call.1} parent=5 // pred_check_branch
        %166 = sbr.rel (%p164) target = $region28
      $region27: #{tpu_custom_call.1} parent=5 // pred_region
        // Predicated region
        $region29: #{tpu_custom_call.1} parent=27 // pred_check
          %p167 = pneg %p34
        $region30: #{tpu_custom_call.1} parent=27 // pred_check_branch
          %169 = sbr.rel (%p167) target = $region32
        $region31: #{tpu_custom_call.1} parent=27 // pred_region
          %s170 = smul.u32 16, %s14
          %p171 = scmp.lt.s32.totalorder %s170, 31
          %s172 = scalar_select %p171, %s170, 31
          %s173 = smul.addr %s172, 8
          %s174 = scalar_lea.vmem %s0, %s173
          %s175 = smul.u32 16, %s14
        $region32: #{tpu_custom_call.1} parent=27 // pred_fallthru
          _
      $region28: #{tpu_custom_call.1} parent=5 // pred_fallthru
        _
      %p176 = scmp.le.s32.totalorder 1, %s14
      %p177 = scmp.lt.s32.totalorder %s14, 3
      %p178 = pnand %p176, %p177
      %p179 = pneg %p178
      // Predicated region
      $region33: #{tpu_custom_call.1} parent=5 // pred_check
        _
      $region34: #{tpu_custom_call.1} parent=5 // pred_check_branch
        %181 = sbr.rel (%p178) target = $region36
      $region35: #{tpu_custom_call.1} parent=5 // pred_region
        %s182 = ssub.s32 %s14, 1
        // Predicated region
        $region37: #{tpu_custom_call.1} parent=35 // pred_check
          %p183 = pneg %p82
        $region38: #{tpu_custom_call.1} parent=35 // pred_check_branch
          %185 = sbr.rel (%p183) target = $region40
        $region39: #{tpu_custom_call.1} parent=35 // pred_region
          %186 = dma.done [#allocation3], 8192
        $region40: #{tpu_custom_call.1} parent=35 // pred_fallthru
          _
        %s187 = smul.u32 16, %s19
        %p188 = scmp.lt.s32.totalorder %s187, 31
        %s189 = scalar_select %p188, %s187, 31
        %s190 = smul.addr %s189, 8
        %s191 = scalar_lea.vmem %s0, %s190
        %p192 = pneg %p40
        %p193 = pneg %p37
        %p194 = pneg %p61
        %p195 = pneg %p58
        %p196 = pneg %p82
        %p197 = pneg %p79
        %p198 = pneg %p103
        %p199 = pneg %p100
        %p200 = pneg %p129
        %p201 = pneg %p126
        %s202 = sand.u32 %s116, 1
        %s203 = scalar_lea.sflag [#allocation4], %s202
        %s204 = sand.u32 %s116, 1
        %s205 = smul.addr %s204, 128
        %s206 = scalar_lea.vmem [#allocation5], %s205
        %s207 = smul.u32 16, %s19
        %p208 = scmp.lt.s32.totalorder %s207, 31
        %s209 = scalar_select %p208, %s207, 31
        %s210 = smul.addr %s209, 8
        %s211 = scalar_lea.vmem %s0, %s210
        %s212 = smul.u32 16, %s19
        %s213 = smul.u32 16, %s19
        %v214 = vld [vmem:[%s211] sm:$0xff]
        %v215 = vld [vmem:[%s211 + $0x8] sm:$0xff]
        %v216 = vld [vmem:[%s211 + $0x10] sm:$0xff]
        %v217 = vld [vmem:[%s211 + $0x18] sm:$0xff]
        %v218 = vld [vmem:[%s211 + $0x20] sm:$0xff]
        %v219 = vld [vmem:[%s211 + $0x28] sm:$0xff]
        %v220 = vld [vmem:[%s211 + $0x30] sm:$0xff]
        %v221 = vld [vmem:[%s211 + $0x38] sm:$0xff]
        %v222 = vld [vmem:[%s211 + $0x40] sm:$0xff]
        %v223 = vld [vmem:[%s211 + $0x48] sm:$0xff]
        %v224 = vld [vmem:[%s211 + $0x50] sm:$0xff]
        %v225 = vld [vmem:[%s211 + $0x58] sm:$0xff]
        %v226 = vld [vmem:[%s211 + $0x60] sm:$0xff]
        %v227 = vld [vmem:[%s211 + $0x68] sm:$0xff]
        %v228 = vld [vmem:[%s211 + $0x70] sm:$0xff]
        %v229 = vld [vmem:[%s211 + $0x78] sm:$0xff]
        %v230 = vld [vmem:[%s1] sm:$0xff]
        %v231 = vld [vmem:[%s1 + $0x8] sm:$0xff]
        %v232 = vld [vmem:[%s1 + $0x10] sm:$0xff]
        %v233 = vld [vmem:[%s1 + $0x18] sm:$0xff]
        %v234 = vld [vmem:[%s1 + $0x20] sm:$0xff]
        %v235 = vld [vmem:[%s1 + $0x28] sm:$0xff]
        %v236 = vld [vmem:[%s1 + $0x30] sm:$0xff]
        %v237 = vld [vmem:[%s1 + $0x38] sm:$0xff]
        %v238 = vld [vmem:[%s1 + $0x40] sm:$0xff]
        %v239 = vld [vmem:[%s1 + $0x48] sm:$0xff]
        %v240 = vld [vmem:[%s1 + $0x50] sm:$0xff]
        %v241 = vld [vmem:[%s1 + $0x58] sm:$0xff]
        %v242 = vld [vmem:[%s1 + $0x60] sm:$0xff]
        %v243 = vld [vmem:[%s1 + $0x68] sm:$0xff]
        %v244 = vld [vmem:[%s1 + $0x70] sm:$0xff]
        %v245 = vld [vmem:[%s1 + $0x78] sm:$0xff]
        %v246 = vlaneseq
        %v247 = vand.u32 %v246, 127
        %248 = vset.pattern.permute.xlu0 0
        %249 = vperm.xlu0 %248, %v214
        %v250 = vpop.permute.xlu0 %249
        %251 = vset.pattern.permute.xlu0 0
        %252 = vperm.xlu0 %251, %v215
        %v253 = vpop.permute.xlu0 %252
        %254 = vset.pattern.permute.xlu0 0
        %255 = vperm.xlu0 %254, %v216
        %v256 = vpop.permute.xlu0 %255
        %257 = vset.pattern.permute.xlu0 0
        %258 = vperm.xlu0 %257, %v217
        %v259 = vpop.permute.xlu0 %258
        %260 = vset.pattern.permute.xlu0 0
        %261 = vperm.xlu0 %260, %v218
        %v262 = vpop.permute.xlu0 %261
        %263 = vset.pattern.permute.xlu0 0
        %264 = vperm.xlu0 %263, %v219
        %v265 = vpop.permute.xlu0 %264
        %266 = vset.pattern.permute.xlu0 0
        %267 = vperm.xlu0 %266, %v220
        %v268 = vpop.permute.xlu0 %267
        %269 = vset.pattern.permute.xlu0 0
        %270 = vperm.xlu0 %269, %v221
        %v271 = vpop.permute.xlu0 %270
        %272 = vset.pattern.permute.xlu0 0
        %273 = vperm.xlu0 %272, %v222
        %v274 = vpop.permute.xlu0 %273
        %275 = vset.pattern.permute.xlu0 0
        %276 = vperm.xlu0 %275, %v223
        %v277 = vpop.permute.xlu0 %276
        %278 = vset.pattern.permute.xlu0 0
        %279 = vperm.xlu0 %278, %v224
        %v280 = vpop.permute.xlu0 %279
        %281 = vset.pattern.permute.xlu0 0
        %282 = vperm.xlu0 %281, %v225
        %v283 = vpop.permute.xlu0 %282
        %284 = vset.pattern.permute.xlu0 0
        %285 = vperm.xlu0 %284, %v226
        %v286 = vpop.permute.xlu0 %285
        %287 = vset.pattern.permute.xlu0 0
        %288 = vperm.xlu0 %287, %v227
        %v289 = vpop.permute.xlu0 %288
        %290 = vset.pattern.permute.xlu0 0
        %291 = vperm.xlu0 %290, %v228
        %v292 = vpop.permute.xlu0 %291
        %293 = vset.pattern.permute.xlu0 0
        %294 = vperm.xlu0 %293, %v229
        %v295 = vpop.permute.xlu0 %294
        %vm296 = vcmp.eq.s32.totalorder %v250, %v247
        %vm297 = vcmp.eq.s32.totalorder %v253, %v247
        %vm298 = vcmp.eq.s32.totalorder %v256, %v247
        %vm299 = vcmp.eq.s32.totalorder %v259, %v247
        %vm300 = vcmp.eq.s32.totalorder %v262, %v247
        %vm301 = vcmp.eq.s32.totalorder %v265, %v247
        %vm302 = vcmp.eq.s32.totalorder %v268, %v247
        %vm303 = vcmp.eq.s32.totalorder %v271, %v247
        %vm304 = vcmp.eq.s32.totalorder %v274, %v247
        %vm305 = vcmp.eq.s32.totalorder %v277, %v247
        %vm306 = vcmp.eq.s32.totalorder %v280, %v247
        %vm307 = vcmp.eq.s32.totalorder %v283, %v247
        %vm308 = vcmp.eq.s32.totalorder %v286, %v247
        %vm309 = vcmp.eq.s32.totalorder %v289, %v247
        %vm310 = vcmp.eq.s32.totalorder %v292, %v247
        %vm311 = vcmp.eq.s32.totalorder %v295, %v247
        %v312 = vsel %vm296, 1, 0
        %v313 = vsel %vm297, 1, 0
        %v314 = vsel %vm298, 1, 0
        %v315 = vsel %vm299, 1, 0
        %v316 = vsel %vm300, 1, 0
        %v317 = vsel %vm301, 1, 0
        %v318 = vsel %vm302, 1, 0
        %v319 = vsel %vm303, 1, 0
        %v320 = vsel %vm304, 1, 0
        %v321 = vsel %vm305, 1, 0
        %v322 = vsel %vm306, 1, 0
        %v323 = vsel %vm307, 1, 0
        %v324 = vsel %vm308, 1, 0
        %v325 = vsel %vm309, 1, 0
        %v326 = vsel %vm310, 1, 0
        %v327 = vsel %vm311, 1, 0
        %v328 = vcvt.s32.f32 %v312
        %v329 = vcvt.s32.f32 %v313
        %v330 = vcvt.s32.f32 %v314
        %v331 = vcvt.s32.f32 %v315
        %v332 = vcvt.s32.f32 %v316
        %v333 = vcvt.s32.f32 %v317
        %v334 = vcvt.s32.f32 %v318
        %v335 = vcvt.s32.f32 %v319
        %v336 = vcvt.s32.f32 %v320
        %v337 = vcvt.s32.f32 %v321
        %v338 = vcvt.s32.f32 %v322
        %v339 = vcvt.s32.f32 %v323
        %v340 = vcvt.s32.f32 %v324
        %v341 = vcvt.s32.f32 %v325
        %v342 = vcvt.s32.f32 %v326
        %v343 = vcvt.s32.f32 %v327
        %344 = vmatprep.subr.mxu0 0.0
        %345 = vmatpush1.msra.mxu0 %v245
        %346 = vmatprep.subr.mxu0 0.0
        %347 = vmatpush1.msra.mxu0 %v244
        %348 = vmatprep.subr.mxu0 0.0
        %349 = vmatpush1.msra.mxu0 %v243
        %350 = vmatprep.subr.mxu0 0.0
        %351 = vmatpush1.msra.mxu0 %v242
        %352 = vmatprep.subr.mxu0 0.0
        %353 = vmatpush1.msra.mxu0 %v241
        %354 = vmatprep.subr.mxu0 0.0
        %355 = vmatpush1.msra.mxu0 %v240
        %356 = vmatprep.subr.mxu0 0.0
        %357 = vmatpush1.msra.mxu0 %v239
        %358 = vmatprep.subr.mxu0 0.0
        %359 = vmatpush1.msra.mxu0 %v238
        %360 = vmatprep.subr.mxu0 0.0
        %361 = vmatpush1.msra.mxu0 %v237
        %362 = vmatprep.subr.mxu0 0.0
        %363 = vmatpush1.msra.mxu0 %v236
        %364 = vmatprep.subr.mxu0 0.0
        %365 = vmatpush1.msra.mxu0 %v235
        %366 = vmatprep.subr.mxu0 0.0
        %367 = vmatpush1.msra.mxu0 %v234
        %368 = vmatprep.subr.mxu0 0.0
        %369 = vmatpush1.msra.mxu0 %v233
        %370 = vmatprep.subr.mxu0 0.0
        %371 = vmatpush1.msra.mxu0 %v232
        %372 = vmatprep.subr.mxu0 0.0
        %373 = vmatpush1.msra.mxu0 %v231
        %374 = vmatprep.subr.mxu0 0.0
        %375 = vmatpush1.msra.mxu0 %v230
        %376 = vmatprep.subr.mxu0 0.0
        %377 = vmatpush2.msra.mxu0 0.0
        %378 = vmatprep.subr.mxu0 0.0
        %379 = vmatpush2.msra.mxu0 0.0
        %380 = vmatprep.subr.mxu0 0.0
        %381 = vmatpush2.msra.mxu0 0.0
        %382 = vmatprep.subr.mxu0 0.0
        %383 = vmatpush2.msra.mxu0 0.0
        %384 = vmatprep.subr.mxu0 0.0
        %385 = vmatpush2.msra.mxu0 0.0
        %386 = vmatprep.subr.mxu0 0.0
        %387 = vmatpush2.msra.mxu0 0.0
        %388 = vmatprep.subr.mxu0 0.0
        %389 = vmatpush2.msra.mxu0 0.0
        %390 = vmatprep.subr.mxu0 0.0
        %391 = vmatpush2.msra.mxu0 0.0
        %392 = vmatprep.subr.mxu0 0.0
        %393 = vmatpush2.msra.mxu0 0.0
        %394 = vmatprep.subr.mxu0 0.0
        %395 = vmatpush2.msra.mxu0 0.0
        %396 = vmatprep.subr.mxu0 0.0
        %397 = vmatpush2.msra.mxu0 0.0
        %398 = vmatprep.subr.mxu0 0.0
        %399 = vmatpush2.msra.mxu0 0.0
        %400 = vmatprep.subr.mxu0 0.0
        %401 = vmatpush2.msra.mxu0 0.0
        %402 = vmatprep.subr.mxu0 0.0
        %403 = vmatpush2.msra.mxu0 0.0
        %404 = vmatprep.subr.mxu0 0.0
        %405 = vmatpush2.msra.mxu0 0.0
        %406 = vmatprep.subr.mxu0 0.0
        %407 = vmatpush2.msra.mxu0 0.0
        %408 = vmatprep.mubr.f32.mxu0 0.0
        %409 = vmatmul.mubr.f32.gmra.mxu0 %v328
        %v410 = vpop.f32.mrf.mxu0
        %v411 = vadd.f32 0.0, %v410
        %v412 = vpop.f32.mrf.mxu0
        %413 = vmatprep.mubr.f32.mxu0 0.0
        %414 = vmatmul.mubr.f32.gmra.mxu0 %v329
        %v415 = vpop.f32.mrf.mxu0
        %v416 = vadd.f32 0.0, %v415
        %v417 = vpop.f32.mrf.mxu0
        %418 = vmatprep.mubr.f32.mxu0 0.0
        %419 = vmatmul.mubr.f32.gmra.mxu0 %v330
        %v420 = vpop.f32.mrf.mxu0
        %v421 = vadd.f32 0.0, %v420
        %v422 = vpop.f32.mrf.mxu0
        %423 = vmatprep.mubr.f32.mxu0 0.0
        %424 = vmatmul.mubr.f32.gmra.mxu0 %v331
        %v425 = vpop.f32.mrf.mxu0
        %v426 = vadd.f32 0.0, %v425
        %v427 = vpop.f32.mrf.mxu0
        %428 = vmatprep.mubr.f32.mxu0 0.0
        %429 = vmatmul.mubr.f32.gmra.mxu0 %v332
        %v430 = vpop.f32.mrf.mxu0
        %v431 = vadd.f32 0.0, %v430
        %v432 = vpop.f32.mrf.mxu0
        %433 = vmatprep.mubr.f32.mxu0 0.0
        %434 = vmatmul.mubr.f32.gmra.mxu0 %v333
        %v435 = vpop.f32.mrf.mxu0
        %v436 = vadd.f32 0.0, %v435
        %v437 = vpop.f32.mrf.mxu0
        %438 = vmatprep.mubr.f32.mxu0 0.0
        %439 = vmatmul.mubr.f32.gmra.mxu0 %v334
        %v440 = vpop.f32.mrf.mxu0
        %v441 = vadd.f32 0.0, %v440
        %v442 = vpop.f32.mrf.mxu0
        %443 = vmatprep.mubr.f32.mxu0 0.0
        %444 = vmatmul.mubr.f32.gmra.mxu0 %v335
        %v445 = vpop.f32.mrf.mxu0
        %v446 = vadd.f32 0.0, %v445
        %v447 = vpop.f32.mrf.mxu0
        %448 = vmatprep.mubr.f32.mxu0 0.0
        %449 = vmatmul.mubr.f32.gmra.mxu0 %v336
        %v450 = vpop.f32.mrf.mxu0
        %v451 = vadd.f32 0.0, %v450
        %v452 = vpop.f32.mrf.mxu0
        %453 = vmatprep.mubr.f32.mxu0 0.0
        %454 = vmatmul.mubr.f32.gmra.mxu0 %v337
        %v455 = vpop.f32.mrf.mxu0
        %v456 = vadd.f32 0.0, %v455
        %v457 = vpop.f32.mrf.mxu0
        %458 = vmatprep.mubr.f32.mxu0 0.0
        %459 = vmatmul.mubr.f32.gmra.mxu0 %v338
        %v460 = vpop.f32.mrf.mxu0
        %v461 = vadd.f32 0.0, %v460
        %v462 = vpop.f32.mrf.mxu0
        %463 = vmatprep.mubr.f32.mxu0 0.0
        %464 = vmatmul.mubr.f32.gmra.mxu0 %v339
        %v465 = vpop.f32.mrf.mxu0
        %v466 = vadd.f32 0.0, %v465
        %v467 = vpop.f32.mrf.mxu0
        %468 = vmatprep.mubr.f32.mxu0 0.0
        %469 = vmatmul.mubr.f32.gmra.mxu0 %v340
        %v470 = vpop.f32.mrf.mxu0
        %v471 = vadd.f32 0.0, %v470
        %v472 = vpop.f32.mrf.mxu0
        %473 = vmatprep.mubr.f32.mxu0 0.0
        %474 = vmatmul.mubr.f32.gmra.mxu0 %v341
        %v475 = vpop.f32.mrf.mxu0
        %v476 = vadd.f32 0.0, %v475
        %v477 = vpop.f32.mrf.mxu0
        %478 = vmatprep.mubr.f32.mxu0 0.0
        %479 = vmatmul.mubr.f32.gmra.mxu0 %v342
        %v480 = vpop.f32.mrf.mxu0
        %v481 = vadd.f32 0.0, %v480
        %v482 = vpop.f32.mrf.mxu0
        %483 = vmatprep.mubr.f32.mxu0 0.0
        %484 = vmatmul.mubr.f32.gmra.mxu0 %v343
        %v485 = vpop.f32.mrf.mxu0
        %v486 = vadd.f32 0.0, %v485
        %v487 = vpop.f32.mrf.mxu0
        %488 = vdwg.mxu0
        %v489 = vmax.f32 %v411, 0.0
        %v490 = vmax.f32 %v416, 0.0
        %v491 = vmax.f32 %v421, 0.0
        %v492 = vmax.f32 %v426, 0.0
        %v493 = vmax.f32 %v431, 0.0
        %v494 = vmax.f32 %v436, 0.0
        %v495 = vmax.f32 %v441, 0.0
        %v496 = vmax.f32 %v446, 0.0
        %v497 = vmax.f32 %v451, 0.0
        %v498 = vmax.f32 %v456, 0.0
        %v499 = vmax.f32 %v461, 0.0
        %v500 = vmax.f32 %v466, 0.0
        %v501 = vmax.f32 %v471, 0.0
        %v502 = vmax.f32 %v476, 0.0
        %v503 = vmax.f32 %v481, 0.0
        %v504 = vmax.f32 %v486, 0.0
        %v505 = vld [vmem:[#allocation2] sm:$0xff]
        %v506 = vld [vmem:[#allocation2 + $0x8] sm:$0xff]
        %v507 = vld [vmem:[#allocation2 + $0x10] sm:$0xff]
        %v508 = vld [vmem:[#allocation2 + $0x18] sm:$0xff]
        %v509 = vld [vmem:[#allocation2 + $0x20] sm:$0xff]
        %v510 = vld [vmem:[#allocation2 + $0x28] sm:$0xff]
        %v511 = vld [vmem:[#allocation2 + $0x30] sm:$0xff]
        %v512 = vld [vmem:[#allocation2 + $0x38] sm:$0xff]
        %v513 = vld [vmem:[#allocation2 + $0x40] sm:$0xff]
        %v514 = vld [vmem:[#allocation2 + $0x48] sm:$0xff]
        %v515 = vld [vmem:[#allocation2 + $0x50] sm:$0xff]
        %v516 = vld [vmem:[#allocation2 + $0x58] sm:$0xff]
        %v517 = vld [vmem:[#allocation2 + $0x60] sm:$0xff]
        %v518 = vld [vmem:[#allocation2 + $0x68] sm:$0xff]
        %v519 = vld [vmem:[#allocation2 + $0x70] sm:$0xff]
        %v520 = vld [vmem:[#allocation2 + $0x78] sm:$0xff]
        %521 = vset.pattern.permute.xlu0 1
        %522 = vperm.xlu0 %521, %v214
        %v523 = vpop.permute.xlu0 %522
        %524 = vset.pattern.permute.xlu0 1
        %525 = vperm.xlu0 %524, %v215
        %v526 = vpop.permute.xlu0 %525
        %527 = vset.pattern.permute.xlu0 1
        %528 = vperm.xlu0 %527, %v216
        %v529 = vpop.permute.xlu0 %528
        %530 = vset.pattern.permute.xlu0 1
        %531 = vperm.xlu0 %530, %v217
        %v532 = vpop.permute.xlu0 %531
        %533 = vset.pattern.permute.xlu0 1
        %534 = vperm.xlu0 %533, %v218
        %v535 = vpop.permute.xlu0 %534
        %536 = vset.pattern.permute.xlu0 1
        %537 = vperm.xlu0 %536, %v219
        %v538 = vpop.permute.xlu0 %537
        %539 = vset.pattern.permute.xlu0 1
        %540 = vperm.xlu0 %539, %v220
        %v541 = vpop.permute.xlu0 %540
        %542 = vset.pattern.permute.xlu0 1
        %543 = vperm.xlu0 %542, %v221
        %v544 = vpop.permute.xlu0 %543
        %545 = vset.pattern.permute.xlu0 1
        %546 = vperm.xlu0 %545, %v222
        %v547 = vpop.permute.xlu0 %546
        %548 = vset.pattern.permute.xlu0 1
        %549 = vperm.xlu0 %548, %v223
        %v550 = vpop.permute.xlu0 %549
        %551 = vset.pattern.permute.xlu0 1
        %552 = vperm.xlu0 %551, %v224
        %v553 = vpop.permute.xlu0 %552
        %554 = vset.pattern.permute.xlu0 1
        %555 = vperm.xlu0 %554, %v225
        %v556 = vpop.permute.xlu0 %555
        %557 = vset.pattern.permute.xlu0 1
        %558 = vperm.xlu0 %557, %v226
        %v559 = vpop.permute.xlu0 %558
        %560 = vset.pattern.permute.xlu0 1
        %561 = vperm.xlu0 %560, %v227
        %v562 = vpop.permute.xlu0 %561
        %563 = vset.pattern.permute.xlu0 1
        %564 = vperm.xlu0 %563, %v228
        %v565 = vpop.permute.xlu0 %564
        %566 = vset.pattern.permute.xlu0 1
        %567 = vperm.xlu0 %566, %v229
        %v568 = vpop.permute.xlu0 %567
        %vm569 = vcmp.eq.s32.totalorder %v523, %v247
        %vm570 = vcmp.eq.s32.totalorder %v526, %v247
        %vm571 = vcmp.eq.s32.totalorder %v529, %v247
        %vm572 = vcmp.eq.s32.totalorder %v532, %v247
        %vm573 = vcmp.eq.s32.totalorder %v535, %v247
        %vm574 = vcmp.eq.s32.totalorder %v538, %v247
        %vm575 = vcmp.eq.s32.totalorder %v541, %v247
        %vm576 = vcmp.eq.s32.totalorder %v544, %v247
        %vm577 = vcmp.eq.s32.totalorder %v547, %v247
        %vm578 = vcmp.eq.s32.totalorder %v550, %v247
        %vm579 = vcmp.eq.s32.totalorder %v553, %v247
        %vm580 = vcmp.eq.s32.totalorder %v556, %v247
        %vm581 = vcmp.eq.s32.totalorder %v559, %v247
        %vm582 = vcmp.eq.s32.totalorder %v562, %v247
        %vm583 = vcmp.eq.s32.totalorder %v565, %v247
        %vm584 = vcmp.eq.s32.totalorder %v568, %v247
        %v585 = vsel %vm569, 1, 0
        %v586 = vsel %vm570, 1, 0
        %v587 = vsel %vm571, 1, 0
        %v588 = vsel %vm572, 1, 0
        %v589 = vsel %vm573, 1, 0
        %v590 = vsel %vm574, 1, 0
        %v591 = vsel %vm575, 1, 0
        %v592 = vsel %vm576, 1, 0
        %v593 = vsel %vm577, 1, 0
        %v594 = vsel %vm578, 1, 0
        %v595 = vsel %vm579, 1, 0
        %v596 = vsel %vm580, 1, 0
        %v597 = vsel %vm581, 1, 0
        %v598 = vsel %vm582, 1, 0
        %v599 = vsel %vm583, 1, 0
        %v600 = vsel %vm584, 1, 0
        %v601 = vcvt.s32.f32 %v585
        %v602 = vcvt.s32.f32 %v586
        %v603 = vcvt.s32.f32 %v587
        %v604 = vcvt.s32.f32 %v588
        %v605 = vcvt.s32.f32 %v589
        %v606 = vcvt.s32.f32 %v590
        %v607 = vcvt.s32.f32 %v591
        %v608 = vcvt.s32.f32 %v592
        %v609 = vcvt.s32.f32 %v593
        %v610 = vcvt.s32.f32 %v594
        %v611 = vcvt.s32.f32 %v595
        %v612 = vcvt.s32.f32 %v596
        %v613 = vcvt.s32.f32 %v597
        %v614 = vcvt.s32.f32 %v598
        %v615 = vcvt.s32.f32 %v599
        %v616 = vcvt.s32.f32 %v600
        %617 = vmatprep.subr.mxu0 0.0
        %618 = vmatpush1.msra.mxu0 %v245
        %619 = vmatprep.subr.mxu0 0.0
        %620 = vmatpush1.msra.mxu0 %v244
        %621 = vmatprep.subr.mxu0 0.0
        %622 = vmatpush1.msra.mxu0 %v243
        %623 = vmatprep.subr.mxu0 0.0
        %624 = vmatpush1.msra.mxu0 %v242
        %625 = vmatprep.subr.mxu0 0.0
        %626 = vmatpush1.msra.mxu0 %v241
        %627 = vmatprep.subr.mxu0 0.0
        %628 = vmatpush1.msra.mxu0 %v240
        %629 = vmatprep.subr.mxu0 0.0
        %630 = vmatpush1.msra.mxu0 %v239
        %631 = vmatprep.subr.mxu0 0.0
        %632 = vmatpush1.msra.mxu0 %v238
        %633 = vmatprep.subr.mxu0 0.0
        %634 = vmatpush1.msra.mxu0 %v237
        %635 = vmatprep.subr.mxu0 0.0
        %636 = vmatpush1.msra.mxu0 %v236
        %637 = vmatprep.subr.mxu0 0.0
        %638 = vmatpush1.msra.mxu0 %v235
        %639 = vmatprep.subr.mxu0 0.0
        %640 = vmatpush1.msra.mxu0 %v234
        %641 = vmatprep.subr.mxu0 0.0
        %642 = vmatpush1.msra.mxu0 %v233
        %643 = vmatprep.subr.mxu0 0.0
        %644 = vmatpush1.msra.mxu0 %v232
        %645 = vmatprep.subr.mxu0 0.0
        %646 = vmatpush1.msra.mxu0 %v231
        %647 = vmatprep.subr.mxu0 0.0
        %648 = vmatpush1.msra.mxu0 %v230
        %649 = vmatprep.subr.mxu0 0.0
        %650 = vmatpush2.msra.mxu0 0.0
        %651 = vmatprep.subr.mxu0 0.0
        %652 = vmatpush2.msra.mxu0 0.0
        %653 = vmatprep.subr.mxu0 0.0
        %654 = vmatpush2.msra.mxu0 0.0
        %655 = vmatprep.subr.mxu0 0.0
        %656 = vmatpush2.msra.mxu0 0.0
        %657 = vmatprep.subr.mxu0 0.0
        %658 = vmatpush2.msra.mxu0 0.0
        %659 = vmatprep.subr.mxu0 0.0
        %660 = vmatpush2.msra.mxu0 0.0
        %661 = vmatprep.subr.mxu0 0.0
        %662 = vmatpush2.msra.mxu0 0.0
        %663 = vmatprep.subr.mxu0 0.0
        %664 = vmatpush2.msra.mxu0 0.0
        %665 = vmatprep.subr.mxu0 0.0
        %666 = vmatpush2.msra.mxu0 0.0
        %667 = vmatprep.subr.mxu0 0.0
        %668 = vmatpush2.msra.mxu0 0.0
        %669 = vmatprep.subr.mxu0 0.0
        %670 = vmatpush2.msra.mxu0 0.0
        %671 = vmatprep.subr.mxu0 0.0
        %672 = vmatpush2.msra.mxu0 0.0
        %673 = vmatprep.subr.mxu0 0.0
        %674 = vmatpush2.msra.mxu0 0.0
        %675 = vmatprep.subr.mxu0 0.0
        %676 = vmatpush2.msra.mxu0 0.0
        %677 = vmatprep.subr.mxu0 0.0
        %678 = vmatpush2.msra.mxu0 0.0
        %679 = vmatprep.subr.mxu0 0.0
        %680 = vmatpush2.msra.mxu0 0.0
        %681 = vmatprep.mubr.f32.mxu0 0.0
        %682 = vmatmul.mubr.f32.gmra.mxu0 %v601
        %v683 = vpop.f32.mrf.mxu0
        %v684 = vadd.f32 0.0, %v683
        %v685 = vpop.f32.mrf.mxu0
        %686 = vmatprep.mubr.f32.mxu0 0.0
        %687 = vmatmul.mubr.f32.gmra.mxu0 %v602
        %v688 = vpop.f32.mrf.mxu0
        %v689 = vadd.f32 0.0, %v688
        %v690 = vpop.f32.mrf.mxu0
        %691 = vmatprep.mubr.f32.mxu0 0.0
        %692 = vmatmul.mubr.f32.gmra.mxu0 %v603
        %v693 = vpop.f32.mrf.mxu0
        %v694 = vadd.f32 0.0, %v693
        %v695 = vpop.f32.mrf.mxu0
        %696 = vmatprep.mubr.f32.mxu0 0.0
        %697 = vmatmul.mubr.f32.gmra.mxu0 %v604
        %v698 = vpop.f32.mrf.mxu0
        %v699 = vadd.f32 0.0, %v698
        %v700 = vpop.f32.mrf.mxu0
        %701 = vmatprep.mubr.f32.mxu0 0.0
        %702 = vmatmul.mubr.f32.gmra.mxu0 %v605
        %v703 = vpop.f32.mrf.mxu0
        %v704 = vadd.f32 0.0, %v703
        %v705 = vpop.f32.mrf.mxu0
        %706 = vmatprep.mubr.f32.mxu0 0.0
        %707 = vmatmul.mubr.f32.gmra.mxu0 %v606
        %v708 = vpop.f32.mrf.mxu0
        %v709 = vadd.f32 0.0, %v708
        %v710 = vpop.f32.mrf.mxu0
        %711 = vmatprep.mubr.f32.mxu0 0.0
        %712 = vmatmul.mubr.f32.gmra.mxu0 %v607
        %v713 = vpop.f32.mrf.mxu0
        %v714 = vadd.f32 0.0, %v713
        %v715 = vpop.f32.mrf.mxu0
        %716 = vmatprep.mubr.f32.mxu0 0.0
        %717 = vmatmul.mubr.f32.gmra.mxu0 %v608
        %v718 = vpop.f32.mrf.mxu0
        %v719 = vadd.f32 0.0, %v718
        %v720 = vpop.f32.mrf.mxu0
        %721 = vmatprep.mubr.f32.mxu0 0.0
        %722 = vmatmul.mubr.f32.gmra.mxu0 %v609
        %v723 = vpop.f32.mrf.mxu0
        %v724 = vadd.f32 0.0, %v723
        %v725 = vpop.f32.mrf.mxu0
        %726 = vmatprep.mubr.f32.mxu0 0.0
        %727 = vmatmul.mubr.f32.gmra.mxu0 %v610
        %v728 = vpop.f32.mrf.mxu0
        %v729 = vadd.f32 0.0, %v728
        %v730 = vpop.f32.mrf.mxu0
        %731 = vmatprep.mubr.f32.mxu0 0.0
        %732 = vmatmul.mubr.f32.gmra.mxu0 %v611
        %v733 = vpop.f32.mrf.mxu0
        %v734 = vadd.f32 0.0, %v733
        %v735 = vpop.f32.mrf.mxu0
        %736 = vmatprep.mubr.f32.mxu0 0.0
        %737 = vmatmul.mubr.f32.gmra.mxu0 %v612
        %v738 = vpop.f32.mrf.mxu0
        %v739 = vadd.f32 0.0, %v738
        %v740 = vpop.f32.mrf.mxu0
        %741 = vmatprep.mubr.f32.mxu0 0.0
        %742 = vmatmul.mubr.f32.gmra.mxu0 %v613
        %v743 = vpop.f32.mrf.mxu0
        %v744 = vadd.f32 0.0, %v743
        %v745 = vpop.f32.mrf.mxu0
        %746 = vmatprep.mubr.f32.mxu0 0.0
        %747 = vmatmul.mubr.f32.gmra.mxu0 %v614
        %v748 = vpop.f32.mrf.mxu0
        %v749 = vadd.f32 0.0, %v748
        %v750 = vpop.f32.mrf.mxu0
        %751 = vmatprep.mubr.f32.mxu0 0.0
        %752 = vmatmul.mubr.f32.gmra.mxu0 %v615
        %v753 = vpop.f32.mrf.mxu0
        %v754 = vadd.f32 0.0, %v753
        %v755 = vpop.f32.mrf.mxu0
        %756 = vmatprep.mubr.f32.mxu0 0.0
        %757 = vmatmul.mubr.f32.gmra.mxu0 %v616
        %v758 = vpop.f32.mrf.mxu0
        %v759 = vadd.f32 0.0, %v758
        %v760 = vpop.f32.mrf.mxu0
        %761 = vdwg.mxu0
        %v762 = vmax.f32 %v684, 0.0
        %v763 = vmax.f32 %v689, 0.0
        %v764 = vmax.f32 %v694, 0.0
        %v765 = vmax.f32 %v699, 0.0
        %v766 = vmax.f32 %v704, 0.0
        %v767 = vmax.f32 %v709, 0.0
        %v768 = vmax.f32 %v714, 0.0
        %v769 = vmax.f32 %v719, 0.0
        %v770 = vmax.f32 %v724, 0.0
        %v771 = vmax.f32 %v729, 0.0
        %v772 = vmax.f32 %v734, 0.0
        %v773 = vmax.f32 %v739, 0.0
        %v774 = vmax.f32 %v744, 0.0
        %v775 = vmax.f32 %v749, 0.0
        %v776 = vmax.f32 %v754, 0.0
        %v777 = vmax.f32 %v759, 0.0
        %v778 = vld [vmem:[#allocation2 + $0x80] sm:$0xff]
        %v779 = vld [vmem:[#allocation2 + $0x88] sm:$0xff]
        %v780 = vld [vmem:[#allocation2 + $0x90] sm:$0xff]
        %v781 = vld [vmem:[#allocation2 + $0x98] sm:$0xff]
        %v782 = vld [vmem:[#allocation2 + $0xa0] sm:$0xff]
        %v783 = vld [vmem:[#allocation2 + $0xa8] sm:$0xff]
        %v784 = vld [vmem:[#allocation2 + $0xb0] sm:$0xff]
        %v785 = vld [vmem:[#allocation2 + $0xb8] sm:$0xff]
        %v786 = vld [vmem:[#allocation2 + $0xc0] sm:$0xff]
        %v787 = vld [vmem:[#allocation2 + $0xc8] sm:$0xff]
        %v788 = vld [vmem:[#allocation2 + $0xd0] sm:$0xff]
        %v789 = vld [vmem:[#allocation2 + $0xd8] sm:$0xff]
        %v790 = vld [vmem:[#allocation2 + $0xe0] sm:$0xff]
        %v791 = vld [vmem:[#allocation2 + $0xe8] sm:$0xff]
        %v792 = vld [vmem:[#allocation2 + $0xf0] sm:$0xff]
        %v793 = vld [vmem:[#allocation2 + $0xf8] sm:$0xff]
        %794 = vmatprep.subr.mxu0 0.0
        %795 = vmatpush1.msra.mxu0 %v793
        %796 = vmatprep.subr.mxu0 0.0
        %797 = vmatpush1.msra.mxu0 %v792
        %798 = vmatprep.subr.mxu0 0.0
        %799 = vmatpush1.msra.mxu0 %v791
        %800 = vmatprep.subr.mxu0 0.0
        %801 = vmatpush1.msra.mxu0 %v790
        %802 = vmatprep.subr.mxu0 0.0
        %803 = vmatpush1.msra.mxu0 %v789
        %804 = vmatprep.subr.mxu0 0.0
        %805 = vmatpush1.msra.mxu0 %v788
        %806 = vmatprep.subr.mxu0 0.0
        %807 = vmatpush1.msra.mxu0 %v787
        %808 = vmatprep.subr.mxu0 0.0
        %809 = vmatpush1.msra.mxu0 %v786
        %810 = vmatprep.subr.mxu0 0.0
        %811 = vmatpush1.msra.mxu0 %v785
        %812 = vmatprep.subr.mxu0 0.0
        %813 = vmatpush1.msra.mxu0 %v784
        %814 = vmatprep.subr.mxu0 0.0
        %815 = vmatpush1.msra.mxu0 %v783
        %816 = vmatprep.subr.mxu0 0.0
        %817 = vmatpush1.msra.mxu0 %v782
        %818 = vmatprep.subr.mxu0 0.0
        %819 = vmatpush1.msra.mxu0 %v781
        %820 = vmatprep.subr.mxu0 0.0
        %821 = vmatpush1.msra.mxu0 %v780
        %822 = vmatprep.subr.mxu0 0.0
        %823 = vmatpush1.msra.mxu0 %v779
        %824 = vmatprep.subr.mxu0 0.0
        %825 = vmatpush1.msra.mxu0 %v778
        %826 = vmatprep.subr.mxu0 0.0
        %827 = vmatpush2.msra.mxu0 0.0
        %828 = vmatprep.subr.mxu0 0.0
        %829 = vmatpush2.msra.mxu0 0.0
        %830 = vmatprep.subr.mxu0 0.0
        %831 = vmatpush2.msra.mxu0 0.0
        %832 = vmatprep.subr.mxu0 0.0
        %833 = vmatpush2.msra.mxu0 0.0
        %834 = vmatprep.subr.mxu0 0.0
        %835 = vmatpush2.msra.mxu0 0.0
        %836 = vmatprep.subr.mxu0 0.0
        %837 = vmatpush2.msra.mxu0 0.0
        %838 = vmatprep.subr.mxu0 0.0
        %839 = vmatpush2.msra.mxu0 0.0
        %840 = vmatprep.subr.mxu0 0.0
        %841 = vmatpush2.msra.mxu0 0.0
        %842 = vmatprep.subr.mxu0 0.0
        %843 = vmatpush2.msra.mxu0 0.0
        %844 = vmatprep.subr.mxu0 0.0
        %845 = vmatpush2.msra.mxu0 0.0
        %846 = vmatprep.subr.mxu0 0.0
        %847 = vmatpush2.msra.mxu0 0.0
        %848 = vmatprep.subr.mxu0 0.0
        %849 = vmatpush2.msra.mxu0 0.0
        %850 = vmatprep.subr.mxu0 0.0
        %851 = vmatpush2.msra.mxu0 0.0
        %852 = vmatprep.subr.mxu0 0.0
        %853 = vmatpush2.msra.mxu0 0.0
        %854 = vmatprep.subr.mxu0 0.0
        %855 = vmatpush2.msra.mxu0 0.0
        %856 = vmatprep.subr.mxu0 0.0
        %857 = vmatpush2.msra.mxu0 0.0
        %858 = vmatprep.mubr.f32.mxu0 0.0
        %859 = vmatmul.mubr.f32.gmra.mxu0 %v762
        %v860 = vpop.f32.mrf.mxu0
        %v861 = vadd.f32 0.0, %v860
        %v862 = vpop.f32.mrf.mxu0
        %863 = vmatprep.mubr.f32.mxu0 0.0
        %864 = vmatmul.mubr.f32.gmra.mxu0 %v763
        %v865 = vpop.f32.mrf.mxu0
        %v866 = vadd.f32 0.0, %v865
        %v867 = vpop.f32.mrf.mxu0
        %868 = vmatprep.mubr.f32.mxu0 0.0
        %869 = vmatmul.mubr.f32.gmra.mxu0 %v764
        %v870 = vpop.f32.mrf.mxu0
        %v871 = vadd.f32 0.0, %v870
        %v872 = vpop.f32.mrf.mxu0
        %873 = vmatprep.mubr.f32.mxu0 0.0
        %874 = vmatmul.mubr.f32.gmra.mxu0 %v765
        %v875 = vpop.f32.mrf.mxu0
        %v876 = vadd.f32 0.0, %v875
        %v877 = vpop.f32.mrf.mxu0
        %878 = vmatprep.mubr.f32.mxu0 0.0
        %879 = vmatmul.mubr.f32.gmra.mxu0 %v766
        %v880 = vpop.f32.mrf.mxu0
        %v881 = vadd.f32 0.0, %v880
        %v882 = vpop.f32.mrf.mxu0
        %883 = vmatprep.mubr.f32.mxu0 0.0
        %884 = vmatmul.mubr.f32.gmra.mxu0 %v767
        %v885 = vpop.f32.mrf.mxu0
        %v886 = vadd.f32 0.0, %v885
        %v887 = vpop.f32.mrf.mxu0
        %888 = vmatprep.mubr.f32.mxu0 0.0
        %889 = vmatmul.mubr.f32.gmra.mxu0 %v768
        %v890 = vpop.f32.mrf.mxu0
        %v891 = vadd.f32 0.0, %v890
        %v892 = vpop.f32.mrf.mxu0
        %893 = vmatprep.mubr.f32.mxu0 0.0
        %894 = vmatmul.mubr.f32.gmra.mxu0 %v769
        %v895 = vpop.f32.mrf.mxu0
        %v896 = vadd.f32 0.0, %v895
        %v897 = vpop.f32.mrf.mxu0
        %898 = vmatprep.mubr.f32.mxu0 0.0
        %899 = vmatmul.mubr.f32.gmra.mxu0 %v770
        %v900 = vpop.f32.mrf.mxu0
        %v901 = vadd.f32 0.0, %v900
        %v902 = vpop.f32.mrf.mxu0
        %903 = vmatprep.mubr.f32.mxu0 0.0
        %904 = vmatmul.mubr.f32.gmra.mxu0 %v771
        %v905 = vpop.f32.mrf.mxu0
        %v906 = vadd.f32 0.0, %v905
        %v907 = vpop.f32.mrf.mxu0
        %908 = vmatprep.mubr.f32.mxu0 0.0
        %909 = vmatmul.mubr.f32.gmra.mxu0 %v772
        %v910 = vpop.f32.mrf.mxu0
        %v911 = vadd.f32 0.0, %v910
        %v912 = vpop.f32.mrf.mxu0
        %913 = vmatprep.mubr.f32.mxu0 0.0
        %914 = vmatmul.mubr.f32.gmra.mxu0 %v773
        %v915 = vpop.f32.mrf.mxu0
        %v916 = vadd.f32 0.0, %v915
        %v917 = vpop.f32.mrf.mxu0
        %918 = vmatprep.mubr.f32.mxu0 0.0
        %919 = vmatmul.mubr.f32.gmra.mxu0 %v774
        %v920 = vpop.f32.mrf.mxu0
        %v921 = vadd.f32 0.0, %v920
        %v922 = vpop.f32.mrf.mxu0
        %923 = vmatprep.mubr.f32.mxu0 0.0
        %924 = vmatmul.mubr.f32.gmra.mxu0 %v775
        %v925 = vpop.f32.mrf.mxu0
        %v926 = vadd.f32 0.0, %v925
        %v927 = vpop.f32.mrf.mxu0
        %928 = vmatprep.mubr.f32.mxu0 0.0
        %929 = vmatmul.mubr.f32.gmra.mxu0 %v776
        %v930 = vpop.f32.mrf.mxu0
        %v931 = vadd.f32 0.0, %v930
        %v932 = vpop.f32.mrf.mxu0
        %933 = vmatprep.mubr.f32.mxu0 0.0
        %934 = vmatmul.mubr.f32.gmra.mxu0 %v777
        %v935 = vpop.f32.mrf.mxu0
        %v936 = vadd.f32 0.0, %v935
        %v937 = vpop.f32.mrf.mxu0
        %938 = vdwg.mxu0
        %939 = vmatprep.subr.mxu0 0.0
        %940 = vmatpush1.msra.mxu0 %v520
        %941 = vmatprep.subr.mxu0 0.0
        %942 = vmatpush1.msra.mxu0 %v519
        %943 = vmatprep.subr.mxu0 0.0
        %944 = vmatpush1.msra.mxu0 %v518
        %945 = vmatprep.subr.mxu0 0.0
        %946 = vmatpush1.msra.mxu0 %v517
        %947 = vmatprep.subr.mxu0 0.0
        %948 = vmatpush1.msra.mxu0 %v516
        %949 = vmatprep.subr.mxu0 0.0
        %950 = vmatpush1.msra.mxu0 %v515
        %951 = vmatprep.subr.mxu0 0.0
        %952 = vmatpush1.msra.mxu0 %v514
        %953 = vmatprep.subr.mxu0 0.0
        %954 = vmatpush1.msra.mxu0 %v513
        %955 = vmatprep.subr.mxu0 0.0
        %956 = vmatpush1.msra.mxu0 %v512
        %957 = vmatprep.subr.mxu0 0.0
        %958 = vmatpush1.msra.mxu0 %v511
        %959 = vmatprep.subr.mxu0 0.0
        %960 = vmatpush1.msra.mxu0 %v510
        %961 = vmatprep.subr.mxu0 0.0
        %962 = vmatpush1.msra.mxu0 %v509
        %963 = vmatprep.subr.mxu0 0.0
        %964 = vmatpush1.msra.mxu0 %v508
        %965 = vmatprep.subr.mxu0 0.0
        %966 = vmatpush1.msra.mxu0 %v507
        %967 = vmatprep.subr.mxu0 0.0
        %968 = vmatpush1.msra.mxu0 %v506
        %969 = vmatprep.subr.mxu0 0.0
        %970 = vmatpush1.msra.mxu0 %v505
        %971 = vmatprep.subr.mxu0 0.0
        %972 = vmatpush2.msra.mxu0 0.0
        %973 = vmatprep.subr.mxu0 0.0
        %974 = vmatpush2.msra.mxu0 0.0
        %975 = vmatprep.subr.mxu0 0.0
        %976 = vmatpush2.msra.mxu0 0.0
        %977 = vmatprep.subr.mxu0 0.0
        %978 = vmatpush2.msra.mxu0 0.0
        %979 = vmatprep.subr.mxu0 0.0
        %980 = vmatpush2.msra.mxu0 0.0
        %981 = vmatprep.subr.mxu0 0.0
        %982 = vmatpush2.msra.mxu0 0.0
        %983 = vmatprep.subr.mxu0 0.0
        %984 = vmatpush2.msra.mxu0 0.0
        %985 = vmatprep.subr.mxu0 0.0
        %986 = vmatpush2.msra.mxu0 0.0
        %987 = vmatprep.subr.mxu0 0.0
        %988 = vmatpush2.msra.mxu0 0.0
        %989 = vmatprep.subr.mxu0 0.0
        %990 = vmatpush2.msra.mxu0 0.0
        %991 = vmatprep.subr.mxu0 0.0
        %992 = vmatpush2.msra.mxu0 0.0
        %993 = vmatprep.subr.mxu0 0.0
        %994 = vmatpush2.msra.mxu0 0.0
        %995 = vmatprep.subr.mxu0 0.0
        %996 = vmatpush2.msra.mxu0 0.0
        %997 = vmatprep.subr.mxu0 0.0
        %998 = vmatpush2.msra.mxu0 0.0
        %999 = vmatprep.subr.mxu0 0.0
        %1000 = vmatpush2.msra.mxu0 0.0
        %1001 = vmatprep.subr.mxu0 0.0
        %1002 = vmatpush2.msra.mxu0 0.0
        %1003 = vmatprep.mubr.f32.mxu0 0.0
        %1004 = vmatmul.mubr.f32.gmra.mxu0 %v489
        %v1005 = vpop.f32.mrf.mxu0
        %v1006 = vadd.f32 %v861, %v1005
        %v1007 = vpop.f32.mrf.mxu0
        %1008 = vmatprep.mubr.f32.mxu0 0.0
        %1009 = vmatmul.mubr.f32.gmra.mxu0 %v490
        %v1010 = vpop.f32.mrf.mxu0
        %v1011 = vadd.f32 %v866, %v1010
        %v1012 = vpop.f32.mrf.mxu0
        %1013 = vmatprep.mubr.f32.mxu0 0.0
        %1014 = vmatmul.mubr.f32.gmra.mxu0 %v491
        %v1015 = vpop.f32.mrf.mxu0
        %v1016 = vadd.f32 %v871, %v1015
        %v1017 = vpop.f32.mrf.mxu0
        %1018 = vmatprep.mubr.f32.mxu0 0.0
        %1019 = vmatmul.mubr.f32.gmra.mxu0 %v492
        %v1020 = vpop.f32.mrf.mxu0
        %v1021 = vadd.f32 %v876, %v1020
        %v1022 = vpop.f32.mrf.mxu0
        %1023 = vmatprep.mubr.f32.mxu0 0.0
        %1024 = vmatmul.mubr.f32.gmra.mxu0 %v493
        %v1025 = vpop.f32.mrf.mxu0
        %v1026 = vadd.f32 %v881, %v1025
        %v1027 = vpop.f32.mrf.mxu0
        %1028 = vmatprep.mubr.f32.mxu0 0.0
        %1029 = vmatmul.mubr.f32.gmra.mxu0 %v494
        %v1030 = vpop.f32.mrf.mxu0
        %v1031 = vadd.f32 %v886, %v1030
        %v1032 = vpop.f32.mrf.mxu0
        %1033 = vmatprep.mubr.f32.mxu0 0.0
        %1034 = vmatmul.mubr.f32.gmra.mxu0 %v495
        %v1035 = vpop.f32.mrf.mxu0
        %v1036 = vadd.f32 %v891, %v1035
        %v1037 = vpop.f32.mrf.mxu0
        %1038 = vmatprep.mubr.f32.mxu0 0.0
        %1039 = vmatmul.mubr.f32.gmra.mxu0 %v496
        %v1040 = vpop.f32.mrf.mxu0
        %v1041 = vadd.f32 %v896, %v1040
        %v1042 = vpop.f32.mrf.mxu0
        %1043 = vmatprep.mubr.f32.mxu0 0.0
        %1044 = vmatmul.mubr.f32.gmra.mxu0 %v497
        %v1045 = vpop.f32.mrf.mxu0
        %v1046 = vadd.f32 %v901, %v1045
        %v1047 = vpop.f32.mrf.mxu0
        %1048 = vmatprep.mubr.f32.mxu0 0.0
        %1049 = vmatmul.mubr.f32.gmra.mxu0 %v498
        %v1050 = vpop.f32.mrf.mxu0
        %v1051 = vadd.f32 %v906, %v1050
        %v1052 = vpop.f32.mrf.mxu0
        %1053 = vmatprep.mubr.f32.mxu0 0.0
        %1054 = vmatmul.mubr.f32.gmra.mxu0 %v499
        %v1055 = vpop.f32.mrf.mxu0
        %v1056 = vadd.f32 %v911, %v1055
        %v1057 = vpop.f32.mrf.mxu0
        %1058 = vmatprep.mubr.f32.mxu0 0.0
        %1059 = vmatmul.mubr.f32.gmra.mxu0 %v500
        %v1060 = vpop.f32.mrf.mxu0
        %v1061 = vadd.f32 %v916, %v1060
        %v1062 = vpop.f32.mrf.mxu0
        %1063 = vmatprep.mubr.f32.mxu0 0.0
        %1064 = vmatmul.mubr.f32.gmra.mxu0 %v501
        %v1065 = vpop.f32.mrf.mxu0
        %v1066 = vadd.f32 %v921, %v1065
        %v1067 = vpop.f32.mrf.mxu0
        %1068 = vmatprep.mubr.f32.mxu0 0.0
        %1069 = vmatmul.mubr.f32.gmra.mxu0 %v502
        %v1070 = vpop.f32.mrf.mxu0
        %v1071 = vadd.f32 %v926, %v1070
        %v1072 = vpop.f32.mrf.mxu0
        %1073 = vmatprep.mubr.f32.mxu0 0.0
        %1074 = vmatmul.mubr.f32.gmra.mxu0 %v503
        %v1075 = vpop.f32.mrf.mxu0
        %v1076 = vadd.f32 %v931, %v1075
        %v1077 = vpop.f32.mrf.mxu0
        %1078 = vmatprep.mubr.f32.mxu0 0.0
        %1079 = vmatmul.mubr.f32.gmra.mxu0 %v504
        %v1080 = vpop.f32.mrf.mxu0
        %v1081 = vadd.f32 %v936, %v1080
        %v1082 = vpop.f32.mrf.mxu0
        %1083 = vdwg.mxu0
        %1084 = vset.pattern.permute.xlu0 2
        %1085 = vperm.xlu0 %1084, %v214
        %v1086 = vpop.permute.xlu0 %1085
        %1087 = vset.pattern.permute.xlu0 2
        %1088 = vperm.xlu0 %1087, %v215
        %v1089 = vpop.permute.xlu0 %1088
        %1090 = vset.pattern.permute.xlu0 2
        %1091 = vperm.xlu0 %1090, %v216
        %v1092 = vpop.permute.xlu0 %1091
        %1093 = vset.pattern.permute.xlu0 2
        %1094 = vperm.xlu0 %1093, %v217
        %v1095 = vpop.permute.xlu0 %1094
        %1096 = vset.pattern.permute.xlu0 2
        %1097 = vperm.xlu0 %1096, %v218
        %v1098 = vpop.permute.xlu0 %1097
        %1099 = vset.pattern.permute.xlu0 2
        %1100 = vperm.xlu0 %1099, %v219
        %v1101 = vpop.permute.xlu0 %1100
        %1102 = vset.pattern.permute.xlu0 2
        %1103 = vperm.xlu0 %1102, %v220
        %v1104 = vpop.permute.xlu0 %1103
        %1105 = vset.pattern.permute.xlu0 2
        %1106 = vperm.xlu0 %1105, %v221
        %v1107 = vpop.permute.xlu0 %1106
        %1108 = vset.pattern.permute.xlu0 2
        %1109 = vperm.xlu0 %1108, %v222
        %v1110 = vpop.permute.xlu0 %1109
        %1111 = vset.pattern.permute.xlu0 2
        %1112 = vperm.xlu0 %1111, %v223
        %v1113 = vpop.permute.xlu0 %1112
        %1114 = vset.pattern.permute.xlu0 2
        %1115 = vperm.xlu0 %1114, %v224
        %v1116 = vpop.permute.xlu0 %1115
        %1117 = vset.pattern.permute.xlu0 2
        %1118 = vperm.xlu0 %1117, %v225
        %v1119 = vpop.permute.xlu0 %1118
        %1120 = vset.pattern.permute.xlu0 2
        %1121 = vperm.xlu0 %1120, %v226
        %v1122 = vpop.permute.xlu0 %1121
        %1123 = vset.pattern.permute.xlu0 2
        %1124 = vperm.xlu0 %1123, %v227
        %v1125 = vpop.permute.xlu0 %1124
        %1126 = vset.pattern.permute.xlu0 2
        %1127 = vperm.xlu0 %1126, %v228
        %v1128 = vpop.permute.xlu0 %1127
        %1129 = vset.pattern.permute.xlu0 2
        %1130 = vperm.xlu0 %1129, %v229
        %v1131 = vpop.permute.xlu0 %1130
        %vm1132 = vcmp.eq.s32.totalorder %v1086, %v247
        %vm1133 = vcmp.eq.s32.totalorder %v1089, %v247
        %vm1134 = vcmp.eq.s32.totalorder %v1092, %v247
        %vm1135 = vcmp.eq.s32.totalorder %v1095, %v247
        %vm1136 = vcmp.eq.s32.totalorder %v1098, %v247
        %vm1137 = vcmp.eq.s32.totalorder %v1101, %v247
        %vm1138 = vcmp.eq.s32.totalorder %v1104, %v247
        %vm1139 = vcmp.eq.s32.totalorder %v1107, %v247
        %vm1140 = vcmp.eq.s32.totalorder %v1110, %v247
        %vm1141 = vcmp.eq.s32.totalorder %v1113, %v247
        %vm1142 = vcmp.eq.s32.totalorder %v1116, %v247
        %vm1143 = vcmp.eq.s32.totalorder %v1119, %v247
        %vm1144 = vcmp.eq.s32.totalorder %v1122, %v247
        %vm1145 = vcmp.eq.s32.totalorder %v1125, %v247
        %vm1146 = vcmp.eq.s32.totalorder %v1128, %v247
        %vm1147 = vcmp.eq.s32.totalorder %v1131, %v247
        %v1148 = vsel %vm1132, 1, 0
        %v1149 = vsel %vm1133, 1, 0
        %v1150 = vsel %vm1134, 1, 0
        %v1151 = vsel %vm1135, 1, 0
        %v1152 = vsel %vm1136, 1, 0
        %v1153 = vsel %vm1137, 1, 0
        %v1154 = vsel %vm1138, 1, 0
        %v1155 = vsel %vm1139, 1, 0
        %v1156 = vsel %vm1140, 1, 0
        %v1157 = vsel %vm1141, 1, 0
        %v1158 = vsel %vm1142, 1, 0
        %v1159 = vsel %vm1143, 1, 0
        %v1160 = vsel %vm1144, 1, 0
        %v1161 = vsel %vm1145, 1, 0
        %v1162 = vsel %vm1146, 1, 0
        %v1163 = vsel %vm1147, 1, 0
        %v1164 = vcvt.s32.f32 %v1148
        %v1165 = vcvt.s32.f32 %v1149
        %v1166 = vcvt.s32.f32 %v1150
        %v1167 = vcvt.s32.f32 %v1151
        %v1168 = vcvt.s32.f32 %v1152
        %v1169 = vcvt.s32.f32 %v1153
        %v1170 = vcvt.s32.f32 %v1154
        %v1171 = vcvt.s32.f32 %v1155
        %v1172 = vcvt.s32.f32 %v1156
        %v1173 = vcvt.s32.f32 %v1157
        %v1174 = vcvt.s32.f32 %v1158
        %v1175 = vcvt.s32.f32 %v1159
        %v1176 = vcvt.s32.f32 %v1160
        %v1177 = vcvt.s32.f32 %v1161
        %v1178 = vcvt.s32.f32 %v1162
        %v1179 = vcvt.s32.f32 %v1163
        %1180 = vmatprep.subr.mxu0 0.0
        %1181 = vmatpush1.msra.mxu0 %v245
        %1182 = vmatprep.subr.mxu0 0.0
        %1183 = vmatpush1.msra.mxu0 %v244
        %1184 = vmatprep.subr.mxu0 0.0
        %1185 = vmatpush1.msra.mxu0 %v243
        %1186 = vmatprep.subr.mxu0 0.0
        %1187 = vmatpush1.msra.mxu0 %v242
        %1188 = vmatprep.subr.mxu0 0.0
        %1189 = vmatpush1.msra.mxu0 %v241
        %1190 = vmatprep.subr.mxu0 0.0
        %1191 = vmatpush1.msra.mxu0 %v240
        %1192 = vmatprep.subr.mxu0 0.0
        %1193 = vmatpush1.msra.mxu0 %v239
        %1194 = vmatprep.subr.mxu0 0.0
        %1195 = vmatpush1.msra.mxu0 %v238
        %1196 = vmatprep.subr.mxu0 0.0
        %1197 = vmatpush1.msra.mxu0 %v237
        %1198 = vmatprep.subr.mxu0 0.0
        %1199 = vmatpush1.msra.mxu0 %v236
        %1200 = vmatprep.subr.mxu0 0.0
        %1201 = vmatpush1.msra.mxu0 %v235
        %1202 = vmatprep.subr.mxu0 0.0
        %1203 = vmatpush1.msra.mxu0 %v234
        %1204 = vmatprep.subr.mxu0 0.0
        %1205 = vmatpush1.msra.mxu0 %v233
        %1206 = vmatprep.subr.mxu0 0.0
        %1207 = vmatpush1.msra.mxu0 %v232
        %1208 = vmatprep.subr.mxu0 0.0
        %1209 = vmatpush1.msra.mxu0 %v231
        %1210 = vmatprep.subr.mxu0 0.0
        %1211 = vmatpush1.msra.mxu0 %v230
        %1212 = vmatprep.subr.mxu0 0.0
        %1213 = vmatpush2.msra.mxu0 0.0
        %1214 = vmatprep.subr.mxu0 0.0
        %1215 = vmatpush2.msra.mxu0 0.0
        %1216 = vmatprep.subr.mxu0 0.0
        %1217 = vmatpush2.msra.mxu0 0.0
        %1218 = vmatprep.subr.mxu0 0.0
        %1219 = vmatpush2.msra.mxu0 0.0
        %1220 = vmatprep.subr.mxu0 0.0
        %1221 = vmatpush2.msra.mxu0 0.0
        %1222 = vmatprep.subr.mxu0 0.0
        %1223 = vmatpush2.msra.mxu0 0.0
        %1224 = vmatprep.subr.mxu0 0.0
        %1225 = vmatpush2.msra.mxu0 0.0
        %1226 = vmatprep.subr.mxu0 0.0
        %1227 = vmatpush2.msra.mxu0 0.0
        %1228 = vmatprep.subr.mxu0 0.0
        %1229 = vmatpush2.msra.mxu0 0.0
        %1230 = vmatprep.subr.mxu0 0.0
        %1231 = vmatpush2.msra.mxu0 0.0
        %1232 = vmatprep.subr.mxu0 0.0
        %1233 = vmatpush2.msra.mxu0 0.0
        %1234 = vmatprep.subr.mxu0 0.0
        %1235 = vmatpush2.msra.mxu0 0.0
        %1236 = vmatprep.subr.mxu0 0.0
        %1237 = vmatpush2.msra.mxu0 0.0
        %1238 = vmatprep.subr.mxu0 0.0
        %1239 = vmatpush2.msra.mxu0 0.0
        %1240 = vmatprep.subr.mxu0 0.0
        %1241 = vmatpush2.msra.mxu0 0.0
        %1242 = vmatprep.subr.mxu0 0.0
        %1243 = vmatpush2.msra.mxu0 0.0
        %1244 = vmatprep.mubr.f32.mxu0 0.0
        %1245 = vmatmul.mubr.f32.gmra.mxu0 %v1164
        %v1246 = vpop.f32.mrf.mxu0
        %v1247 = vadd.f32 0.0, %v1246
        %v1248 = vpop.f32.mrf.mxu0
        %1249 = vmatprep.mubr.f32.mxu0 0.0
        %1250 = vmatmul.mubr.f32.gmra.mxu0 %v1165
        %v1251 = vpop.f32.mrf.mxu0
        %v1252 = vadd.f32 0.0, %v1251
        %v1253 = vpop.f32.mrf.mxu0
        %1254 = vmatprep.mubr.f32.mxu0 0.0
        %1255 = vmatmul.mubr.f32.gmra.mxu0 %v1166
        %v1256 = vpop.f32.mrf.mxu0
        %v1257 = vadd.f32 0.0, %v1256
        %v1258 = vpop.f32.mrf.mxu0
        %1259 = vmatprep.mubr.f32.mxu0 0.0
        %1260 = vmatmul.mubr.f32.gmra.mxu0 %v1167
        %v1261 = vpop.f32.mrf.mxu0
        %v1262 = vadd.f32 0.0, %v1261
        %v1263 = vpop.f32.mrf.mxu0
        %1264 = vmatprep.mubr.f32.mxu0 0.0
        %1265 = vmatmul.mubr.f32.gmra.mxu0 %v1168
        %v1266 = vpop.f32.mrf.mxu0
        %v1267 = vadd.f32 0.0, %v1266
        %v1268 = vpop.f32.mrf.mxu0
        %1269 = vmatprep.mubr.f32.mxu0 0.0
        %1270 = vmatmul.mubr.f32.gmra.mxu0 %v1169
        %v1271 = vpop.f32.mrf.mxu0
        %v1272 = vadd.f32 0.0, %v1271
        %v1273 = vpop.f32.mrf.mxu0
        %1274 = vmatprep.mubr.f32.mxu0 0.0
        %1275 = vmatmul.mubr.f32.gmra.mxu0 %v1170
        %v1276 = vpop.f32.mrf.mxu0
        %v1277 = vadd.f32 0.0, %v1276
        %v1278 = vpop.f32.mrf.mxu0
        %1279 = vmatprep.mubr.f32.mxu0 0.0
        %1280 = vmatmul.mubr.f32.gmra.mxu0 %v1171
        %v1281 = vpop.f32.mrf.mxu0
        %v1282 = vadd.f32 0.0, %v1281
        %v1283 = vpop.f32.mrf.mxu0
        %1284 = vmatprep.mubr.f32.mxu0 0.0
        %1285 = vmatmul.mubr.f32.gmra.mxu0 %v1172
        %v1286 = vpop.f32.mrf.mxu0
        %v1287 = vadd.f32 0.0, %v1286
        %v1288 = vpop.f32.mrf.mxu0
        %1289 = vmatprep.mubr.f32.mxu0 0.0
        %1290 = vmatmul.mubr.f32.gmra.mxu0 %v1173
        %v1291 = vpop.f32.mrf.mxu0
        %v1292 = vadd.f32 0.0, %v1291
        %v1293 = vpop.f32.mrf.mxu0
        %1294 = vmatprep.mubr.f32.mxu0 0.0
        %1295 = vmatmul.mubr.f32.gmra.mxu0 %v1174
        %v1296 = vpop.f32.mrf.mxu0
        %v1297 = vadd.f32 0.0, %v1296
        %v1298 = vpop.f32.mrf.mxu0
        %1299 = vmatprep.mubr.f32.mxu0 0.0
        %1300 = vmatmul.mubr.f32.gmra.mxu0 %v1175
        %v1301 = vpop.f32.mrf.mxu0
        %v1302 = vadd.f32 0.0, %v1301
        %v1303 = vpop.f32.mrf.mxu0
        %1304 = vmatprep.mubr.f32.mxu0 0.0
        %1305 = vmatmul.mubr.f32.gmra.mxu0 %v1176
        %v1306 = vpop.f32.mrf.mxu0
        %v1307 = vadd.f32 0.0, %v1306
        %v1308 = vpop.f32.mrf.mxu0
        %1309 = vmatprep.mubr.f32.mxu0 0.0
        %1310 = vmatmul.mubr.f32.gmra.mxu0 %v1177
        %v1311 = vpop.f32.mrf.mxu0
        %v1312 = vadd.f32 0.0, %v1311
        %v1313 = vpop.f32.mrf.mxu0
        %1314 = vmatprep.mubr.f32.mxu0 0.0
        %1315 = vmatmul.mubr.f32.gmra.mxu0 %v1178
        %v1316 = vpop.f32.mrf.mxu0
        %v1317 = vadd.f32 0.0, %v1316
        %v1318 = vpop.f32.mrf.mxu0
        %1319 = vmatprep.mubr.f32.mxu0 0.0
        %1320 = vmatmul.mubr.f32.gmra.mxu0 %v1179
        %v1321 = vpop.f32.mrf.mxu0
        %v1322 = vadd.f32 0.0, %v1321
        %v1323 = vpop.f32.mrf.mxu0
        %1324 = vdwg.mxu0
        %v1325 = vmax.f32 %v1247, 0.0
        %v1326 = vmax.f32 %v1252, 0.0
        %v1327 = vmax.f32 %v1257, 0.0
        %v1328 = vmax.f32 %v1262, 0.0
        %v1329 = vmax.f32 %v1267, 0.0
        %v1330 = vmax.f32 %v1272, 0.0
        %v1331 = vmax.f32 %v1277, 0.0
        %v1332 = vmax.f32 %v1282, 0.0
        %v1333 = vmax.f32 %v1287, 0.0
        %v1334 = vmax.f32 %v1292, 0.0
        %v1335 = vmax.f32 %v1297, 0.0
        %v1336 = vmax.f32 %v1302, 0.0
        %v1337 = vmax.f32 %v1307, 0.0
        %v1338 = vmax.f32 %v1312, 0.0
        %v1339 = vmax.f32 %v1317, 0.0
        %v1340 = vmax.f32 %v1322, 0.0
        %v1341 = vld [vmem:[#allocation2 + $0x100] sm:$0xff]
        %v1342 = vld [vmem:[#allocation2 + $0x108] sm:$0xff]
        %v1343 = vld [vmem:[#allocation2 + $0x110] sm:$0xff]
        %v1344 = vld [vmem:[#allocation2 + $0x118] sm:$0xff]
        %v1345 = vld [vmem:[#allocation2 + $0x120] sm:$0xff]
        %v1346 = vld [vmem:[#allocation2 + $0x128] sm:$0xff]
        %v1347 = vld [vmem:[#allocation2 + $0x130] sm:$0xff]
        %v1348 = vld [vmem:[#allocation2 + $0x138] sm:$0xff]
        %v1349 = vld [vmem:[#allocation2 + $0x140] sm:$0xff]
        %v1350 = vld [vmem:[#allocation2 + $0x148] sm:$0xff]
        %v1351 = vld [vmem:[#allocation2 + $0x150] sm:$0xff]
        %v1352 = vld [vmem:[#allocation2 + $0x158] sm:$0xff]
        %v1353 = vld [vmem:[#allocation2 + $0x160] sm:$0xff]
        %v1354 = vld [vmem:[#allocation2 + $0x168] sm:$0xff]
        %v1355 = vld [vmem:[#allocation2 + $0x170] sm:$0xff]
        %v1356 = vld [vmem:[#allocation2 + $0x178] sm:$0xff]
        %1357 = vmatprep.subr.mxu0 0.0
        %1358 = vmatpush1.msra.mxu0 %v1356
        %1359 = vmatprep.subr.mxu0 0.0
        %1360 = vmatpush1.msra.mxu0 %v1355
        %1361 = vmatprep.subr.mxu0 0.0
        %1362 = vmatpush1.msra.mxu0 %v1354
        %1363 = vmatprep.subr.mxu0 0.0
        %1364 = vmatpush1.msra.mxu0 %v1353
        %1365 = vmatprep.subr.mxu0 0.0
        %1366 = vmatpush1.msra.mxu0 %v1352
        %1367 = vmatprep.subr.mxu0 0.0
        %1368 = vmatpush1.msra.mxu0 %v1351
        %1369 = vmatprep.subr.mxu0 0.0
        %1370 = vmatpush1.msra.mxu0 %v1350
        %1371 = vmatprep.subr.mxu0 0.0
        %1372 = vmatpush1.msra.mxu0 %v1349
        %1373 = vmatprep.subr.mxu0 0.0
        %1374 = vmatpush1.msra.mxu0 %v1348
        %1375 = vmatprep.subr.mxu0 0.0
        %1376 = vmatpush1.msra.mxu0 %v1347
        %1377 = vmatprep.subr.mxu0 0.0
        %1378 = vmatpush1.msra.mxu0 %v1346
        %1379 = vmatprep.subr.mxu0 0.0
        %1380 = vmatpush1.msra.mxu0 %v1345
        %1381 = vmatprep.subr.mxu0 0.0
        %1382 = vmatpush1.msra.mxu0 %v1344
        %1383 = vmatprep.subr.mxu0 0.0
        %1384 = vmatpush1.msra.mxu0 %v1343
        %1385 = vmatprep.subr.mxu0 0.0
        %1386 = vmatpush1.msra.mxu0 %v1342
        %1387 = vmatprep.subr.mxu0 0.0
        %1388 = vmatpush1.msra.mxu0 %v1341
        %1389 = vmatprep.subr.mxu0 0.0
        %1390 = vmatpush2.msra.mxu0 0.0
        %1391 = vmatprep.subr.mxu0 0.0
        %1392 = vmatpush2.msra.mxu0 0.0
        %1393 = vmatprep.subr.mxu0 0.0
        %1394 = vmatpush2.msra.mxu0 0.0
        %1395 = vmatprep.subr.mxu0 0.0
        %1396 = vmatpush2.msra.mxu0 0.0
        %1397 = vmatprep.subr.mxu0 0.0
        %1398 = vmatpush2.msra.mxu0 0.0
        %1399 = vmatprep.subr.mxu0 0.0
        %1400 = vmatpush2.msra.mxu0 0.0
        %1401 = vmatprep.subr.mxu0 0.0
        %1402 = vmatpush2.msra.mxu0 0.0
        %1403 = vmatprep.subr.mxu0 0.0
        %1404 = vmatpush2.msra.mxu0 0.0
        %1405 = vmatprep.subr.mxu0 0.0
        %1406 = vmatpush2.msra.mxu0 0.0
        %1407 = vmatprep.subr.mxu0 0.0
        %1408 = vmatpush2.msra.mxu0 0.0
        %1409 = vmatprep.subr.mxu0 0.0
        %1410 = vmatpush2.msra.mxu0 0.0
        %1411 = vmatprep.subr.mxu0 0.0
        %1412 = vmatpush2.msra.mxu0 0.0
        %1413 = vmatprep.subr.mxu0 0.0
        %1414 = vmatpush2.msra.mxu0 0.0
        %1415 = vmatprep.subr.mxu0 0.0
        %1416 = vmatpush2.msra.mxu0 0.0
        %1417 = vmatprep.subr.mxu0 0.0
        %1418 = vmatpush2.msra.mxu0 0.0
        %1419 = vmatprep.subr.mxu0 0.0
        %1420 = vmatpush2.msra.mxu0 0.0
        %1421 = vmatprep.mubr.f32.mxu0 0.0
        %1422 = vmatmul.mubr.f32.gmra.mxu0 %v1325
        %v1423 = vpop.f32.mrf.mxu0
        %v1424 = vadd.f32 0.0, %v1423
        %v1425 = vpop.f32.mrf.mxu0
        %1426 = vmatprep.mubr.f32.mxu0 0.0
        %1427 = vmatmul.mubr.f32.gmra.mxu0 %v1326
        %v1428 = vpop.f32.mrf.mxu0
        %v1429 = vadd.f32 0.0, %v1428
        %v1430 = vpop.f32.mrf.mxu0
        %1431 = vmatprep.mubr.f32.mxu0 0.0
        %1432 = vmatmul.mubr.f32.gmra.mxu0 %v1327
        %v1433 = vpop.f32.mrf.mxu0
        %v1434 = vadd.f32 0.0, %v1433
        %v1435 = vpop.f32.mrf.mxu0
        %1436 = vmatprep.mubr.f32.mxu0 0.0
        %1437 = vmatmul.mubr.f32.gmra.mxu0 %v1328
        %v1438 = vpop.f32.mrf.mxu0
        %v1439 = vadd.f32 0.0, %v1438
        %v1440 = vpop.f32.mrf.mxu0
        %1441 = vmatprep.mubr.f32.mxu0 0.0
        %1442 = vmatmul.mubr.f32.gmra.mxu0 %v1329
        %v1443 = vpop.f32.mrf.mxu0
        %v1444 = vadd.f32 0.0, %v1443
        %v1445 = vpop.f32.mrf.mxu0
        %1446 = vmatprep.mubr.f32.mxu0 0.0
        %1447 = vmatmul.mubr.f32.gmra.mxu0 %v1330
        %v1448 = vpop.f32.mrf.mxu0
        %v1449 = vadd.f32 0.0, %v1448
        %v1450 = vpop.f32.mrf.mxu0
        %1451 = vmatprep.mubr.f32.mxu0 0.0
        %1452 = vmatmul.mubr.f32.gmra.mxu0 %v1331
        %v1453 = vpop.f32.mrf.mxu0
        %v1454 = vadd.f32 0.0, %v1453
        %v1455 = vpop.f32.mrf.mxu0
        %1456 = vmatprep.mubr.f32.mxu0 0.0
        %1457 = vmatmul.mubr.f32.gmra.mxu0 %v1332
        %v1458 = vpop.f32.mrf.mxu0
        %v1459 = vadd.f32 0.0, %v1458
        %v1460 = vpop.f32.mrf.mxu0
        %1461 = vmatprep.mubr.f32.mxu0 0.0
        %1462 = vmatmul.mubr.f32.gmra.mxu0 %v1333
        %v1463 = vpop.f32.mrf.mxu0
        %v1464 = vadd.f32 0.0, %v1463
        %v1465 = vpop.f32.mrf.mxu0
        %1466 = vmatprep.mubr.f32.mxu0 0.0
        %1467 = vmatmul.mubr.f32.gmra.mxu0 %v1334
        %v1468 = vpop.f32.mrf.mxu0
        %v1469 = vadd.f32 0.0, %v1468
        %v1470 = vpop.f32.mrf.mxu0
        %1471 = vmatprep.mubr.f32.mxu0 0.0
        %1472 = vmatmul.mubr.f32.gmra.mxu0 %v1335
        %v1473 = vpop.f32.mrf.mxu0
        %v1474 = vadd.f32 0.0, %v1473
        %v1475 = vpop.f32.mrf.mxu0
        %1476 = vmatprep.mubr.f32.mxu0 0.0
        %1477 = vmatmul.mubr.f32.gmra.mxu0 %v1336
        %v1478 = vpop.f32.mrf.mxu0
        %v1479 = vadd.f32 0.0, %v1478
        %v1480 = vpop.f32.mrf.mxu0
        %1481 = vmatprep.mubr.f32.mxu0 0.0
        %1482 = vmatmul.mubr.f32.gmra.mxu0 %v1337
        %v1483 = vpop.f32.mrf.mxu0
        %v1484 = vadd.f32 0.0, %v1483
        %v1485 = vpop.f32.mrf.mxu0
        %1486 = vmatprep.mubr.f32.mxu0 0.0
        %1487 = vmatmul.mubr.f32.gmra.mxu0 %v1338
        %v1488 = vpop.f32.mrf.mxu0
        %v1489 = vadd.f32 0.0, %v1488
        %v1490 = vpop.f32.mrf.mxu0
        %1491 = vmatprep.mubr.f32.mxu0 0.0
        %1492 = vmatmul.mubr.f32.gmra.mxu0 %v1339
        %v1493 = vpop.f32.mrf.mxu0
        %v1494 = vadd.f32 0.0, %v1493
        %v1495 = vpop.f32.mrf.mxu0
        %1496 = vmatprep.mubr.f32.mxu0 0.0
        %1497 = vmatmul.mubr.f32.gmra.mxu0 %v1340
        %v1498 = vpop.f32.mrf.mxu0
        %v1499 = vadd.f32 0.0, %v1498
        %v1500 = vpop.f32.mrf.mxu0
        %1501 = vdwg.mxu0
        %v1502 = vadd.f32 %v1006, %v1424
        %v1503 = vadd.f32 %v1011, %v1429
        %v1504 = vadd.f32 %v1016, %v1434
        %v1505 = vadd.f32 %v1021, %v1439
        %v1506 = vadd.f32 %v1026, %v1444
        %v1507 = vadd.f32 %v1031, %v1449
        %v1508 = vadd.f32 %v1036, %v1454
        %v1509 = vadd.f32 %v1041, %v1459
        %v1510 = vadd.f32 %v1046, %v1464
        %v1511 = vadd.f32 %v1051, %v1469
        %v1512 = vadd.f32 %v1056, %v1474
        %v1513 = vadd.f32 %v1061, %v1479
        %v1514 = vadd.f32 %v1066, %v1484
        %v1515 = vadd.f32 %v1071, %v1489
        %v1516 = vadd.f32 %v1076, %v1494
        %v1517 = vadd.f32 %v1081, %v1499
        %1518 = vset.pattern.permute.xlu0 3
        %1519 = vperm.xlu0 %1518, %v214
        %v1520 = vpop.permute.xlu0 %1519
        %1521 = vset.pattern.permute.xlu0 3
        %1522 = vperm.xlu0 %1521, %v215
        %v1523 = vpop.permute.xlu0 %1522
        %1524 = vset.pattern.permute.xlu0 3
        %1525 = vperm.xlu0 %1524, %v216
        %v1526 = vpop.permute.xlu0 %1525
        %1527 = vset.pattern.permute.xlu0 3
        %1528 = vperm.xlu0 %1527, %v217
        %v1529 = vpop.permute.xlu0 %1528
        %1530 = vset.pattern.permute.xlu0 3
        %1531 = vperm.xlu0 %1530, %v218
        %v1532 = vpop.permute.xlu0 %1531
        %1533 = vset.pattern.permute.xlu0 3
        %1534 = vperm.xlu0 %1533, %v219
        %v1535 = vpop.permute.xlu0 %1534
        %1536 = vset.pattern.permute.xlu0 3
        %1537 = vperm.xlu0 %1536, %v220
        %v1538 = vpop.permute.xlu0 %1537
        %1539 = vset.pattern.permute.xlu0 3
        %1540 = vperm.xlu0 %1539, %v221
        %v1541 = vpop.permute.xlu0 %1540
        %1542 = vset.pattern.permute.xlu0 3
        %1543 = vperm.xlu0 %1542, %v222
        %v1544 = vpop.permute.xlu0 %1543
        %1545 = vset.pattern.permute.xlu0 3
        %1546 = vperm.xlu0 %1545, %v223
        %v1547 = vpop.permute.xlu0 %1546
        %1548 = vset.pattern.permute.xlu0 3
        %1549 = vperm.xlu0 %1548, %v224
        %v1550 = vpop.permute.xlu0 %1549
        %1551 = vset.pattern.permute.xlu0 3
        %1552 = vperm.xlu0 %1551, %v225
        %v1553 = vpop.permute.xlu0 %1552
        %1554 = vset.pattern.permute.xlu0 3
        %1555 = vperm.xlu0 %1554, %v226
        %v1556 = vpop.permute.xlu0 %1555
        %1557 = vset.pattern.permute.xlu0 3
        %1558 = vperm.xlu0 %1557, %v227
        %v1559 = vpop.permute.xlu0 %1558
        %1560 = vset.pattern.permute.xlu0 3
        %1561 = vperm.xlu0 %1560, %v228
        %v1562 = vpop.permute.xlu0 %1561
        %1563 = vset.pattern.permute.xlu0 3
        %1564 = vperm.xlu0 %1563, %v229
        %v1565 = vpop.permute.xlu0 %1564
        %vm1566 = vcmp.eq.s32.totalorder %v1520, %v247
        %vm1567 = vcmp.eq.s32.totalorder %v1523, %v247
        %vm1568 = vcmp.eq.s32.totalorder %v1526, %v247
        %vm1569 = vcmp.eq.s32.totalorder %v1529, %v247
        %vm1570 = vcmp.eq.s32.totalorder %v1532, %v247
        %vm1571 = vcmp.eq.s32.totalorder %v1535, %v247
        %vm1572 = vcmp.eq.s32.totalorder %v1538, %v247
        %vm1573 = vcmp.eq.s32.totalorder %v1541, %v247
        %vm1574 = vcmp.eq.s32.totalorder %v1544, %v247
        %vm1575 = vcmp.eq.s32.totalorder %v1547, %v247
        %vm1576 = vcmp.eq.s32.totalorder %v1550, %v247
        %vm1577 = vcmp.eq.s32.totalorder %v1553, %v247
        %vm1578 = vcmp.eq.s32.totalorder %v1556, %v247
        %vm1579 = vcmp.eq.s32.totalorder %v1559, %v247
        %vm1580 = vcmp.eq.s32.totalorder %v1562, %v247
        %vm1581 = vcmp.eq.s32.totalorder %v1565, %v247
        %v1582 = vsel %vm1566, 1, 0
        %v1583 = vsel %vm1567, 1, 0
        %v1584 = vsel %vm1568, 1, 0
        %v1585 = vsel %vm1569, 1, 0
        %v1586 = vsel %vm1570, 1, 0
        %v1587 = vsel %vm1571, 1, 0
        %v1588 = vsel %vm1572, 1, 0
        %v1589 = vsel %vm1573, 1, 0
        %v1590 = vsel %vm1574, 1, 0
        %v1591 = vsel %vm1575, 1, 0
        %v1592 = vsel %vm1576, 1, 0
        %v1593 = vsel %vm1577, 1, 0
        %v1594 = vsel %vm1578, 1, 0
        %v1595 = vsel %vm1579, 1, 0
        %v1596 = vsel %vm1580, 1, 0
        %v1597 = vsel %vm1581, 1, 0
        %v1598 = vcvt.s32.f32 %v1582
        %v1599 = vcvt.s32.f32 %v1583
        %v1600 = vcvt.s32.f32 %v1584
        %v1601 = vcvt.s32.f32 %v1585
        %v1602 = vcvt.s32.f32 %v1586
        %v1603 = vcvt.s32.f32 %v1587
        %v1604 = vcvt.s32.f32 %v1588
        %v1605 = vcvt.s32.f32 %v1589
        %v1606 = vcvt.s32.f32 %v1590
        %v1607 = vcvt.s32.f32 %v1591
        %v1608 = vcvt.s32.f32 %v1592
        %v1609 = vcvt.s32.f32 %v1593
        %v1610 = vcvt.s32.f32 %v1594
        %v1611 = vcvt.s32.f32 %v1595
        %v1612 = vcvt.s32.f32 %v1596
        %v1613 = vcvt.s32.f32 %v1597
        %1614 = vmatprep.subr.mxu0 0.0
        %1615 = vmatpush1.msra.mxu0 %v245
        %1616 = vmatprep.subr.mxu0 0.0
        %1617 = vmatpush1.msra.mxu0 %v244
        %1618 = vmatprep.subr.mxu0 0.0
        %1619 = vmatpush1.msra.mxu0 %v243
        %1620 = vmatprep.subr.mxu0 0.0
        %1621 = vmatpush1.msra.mxu0 %v242
        %1622 = vmatprep.subr.mxu0 0.0
        %1623 = vmatpush1.msra.mxu0 %v241
        %1624 = vmatprep.subr.mxu0 0.0
        %1625 = vmatpush1.msra.mxu0 %v240
        %1626 = vmatprep.subr.mxu0 0.0
        %1627 = vmatpush1.msra.mxu0 %v239
        %1628 = vmatprep.subr.mxu0 0.0
        %1629 = vmatpush1.msra.mxu0 %v238
        %1630 = vmatprep.subr.mxu0 0.0
        %1631 = vmatpush1.msra.mxu0 %v237
        %1632 = vmatprep.subr.mxu0 0.0
        %1633 = vmatpush1.msra.mxu0 %v236
        %1634 = vmatprep.subr.mxu0 0.0
        %1635 = vmatpush1.msra.mxu0 %v235
        %1636 = vmatprep.subr.mxu0 0.0
        %1637 = vmatpush1.msra.mxu0 %v234
        %1638 = vmatprep.subr.mxu0 0.0
        %1639 = vmatpush1.msra.mxu0 %v233
        %1640 = vmatprep.subr.mxu0 0.0
        %1641 = vmatpush1.msra.mxu0 %v232
        %1642 = vmatprep.subr.mxu0 0.0
        %1643 = vmatpush1.msra.mxu0 %v231
        %1644 = vmatprep.subr.mxu0 0.0
        %1645 = vmatpush1.msra.mxu0 %v230
        %1646 = vmatprep.subr.mxu0 0.0
        %1647 = vmatpush2.msra.mxu0 0.0
        %1648 = vmatprep.subr.mxu0 0.0
        %1649 = vmatpush2.msra.mxu0 0.0
        %1650 = vmatprep.subr.mxu0 0.0
        %1651 = vmatpush2.msra.mxu0 0.0
        %1652 = vmatprep.subr.mxu0 0.0
        %1653 = vmatpush2.msra.mxu0 0.0
        %1654 = vmatprep.subr.mxu0 0.0
        %1655 = vmatpush2.msra.mxu0 0.0
        %1656 = vmatprep.subr.mxu0 0.0
        %1657 = vmatpush2.msra.mxu0 0.0
        %1658 = vmatprep.subr.mxu0 0.0
        %1659 = vmatpush2.msra.mxu0 0.0
        %1660 = vmatprep.subr.mxu0 0.0
        %1661 = vmatpush2.msra.mxu0 0.0
        %1662 = vmatprep.subr.mxu0 0.0
        %1663 = vmatpush2.msra.mxu0 0.0
        %1664 = vmatprep.subr.mxu0 0.0
        %1665 = vmatpush2.msra.mxu0 0.0
        %1666 = vmatprep.subr.mxu0 0.0
        %1667 = vmatpush2.msra.mxu0 0.0
        %1668 = vmatprep.subr.mxu0 0.0
        %1669 = vmatpush2.msra.mxu0 0.0
        %1670 = vmatprep.subr.mxu0 0.0
        %1671 = vmatpush2.msra.mxu0 0.0
        %1672 = vmatprep.subr.mxu0 0.0
        %1673 = vmatpush2.msra.mxu0 0.0
        %1674 = vmatprep.subr.mxu0 0.0
        %1675 = vmatpush2.msra.mxu0 0.0
        %1676 = vmatprep.subr.mxu0 0.0
        %1677 = vmatpush2.msra.mxu0 0.0
        %1678 = vmatprep.mubr.f32.mxu0 0.0
        %1679 = vmatmul.mubr.f32.gmra.mxu0 %v1598
        %v1680 = vpop.f32.mrf.mxu0
        %v1681 = vadd.f32 0.0, %v1680
        %v1682 = vpop.f32.mrf.mxu0
        %1683 = vmatprep.mubr.f32.mxu0 0.0
        %1684 = vmatmul.mubr.f32.gmra.mxu0 %v1599
        %v1685 = vpop.f32.mrf.mxu0
        %v1686 = vadd.f32 0.0, %v1685
        %v1687 = vpop.f32.mrf.mxu0
        %1688 = vmatprep.mubr.f32.mxu0 0.0
        %1689 = vmatmul.mubr.f32.gmra.mxu0 %v1600
        %v1690 = vpop.f32.mrf.mxu0
        %v1691 = vadd.f32 0.0, %v1690
        %v1692 = vpop.f32.mrf.mxu0
        %1693 = vmatprep.mubr.f32.mxu0 0.0
        %1694 = vmatmul.mubr.f32.gmra.mxu0 %v1601
        %v1695 = vpop.f32.mrf.mxu0
        %v1696 = vadd.f32 0.0, %v1695
        %v1697 = vpop.f32.mrf.mxu0
        %1698 = vmatprep.mubr.f32.mxu0 0.0
        %1699 = vmatmul.mubr.f32.gmra.mxu0 %v1602
        %v1700 = vpop.f32.mrf.mxu0
        %v1701 = vadd.f32 0.0, %v1700
        %v1702 = vpop.f32.mrf.mxu0
        %1703 = vmatprep.mubr.f32.mxu0 0.0
        %1704 = vmatmul.mubr.f32.gmra.mxu0 %v1603
        %v1705 = vpop.f32.mrf.mxu0
        %v1706 = vadd.f32 0.0, %v1705
        %v1707 = vpop.f32.mrf.mxu0
        %1708 = vmatprep.mubr.f32.mxu0 0.0
        %1709 = vmatmul.mubr.f32.gmra.mxu0 %v1604
        %v1710 = vpop.f32.mrf.mxu0
        %v1711 = vadd.f32 0.0, %v1710
        %v1712 = vpop.f32.mrf.mxu0
        %1713 = vmatprep.mubr.f32.mxu0 0.0
        %1714 = vmatmul.mubr.f32.gmra.mxu0 %v1605
        %v1715 = vpop.f32.mrf.mxu0
        %v1716 = vadd.f32 0.0, %v1715
        %v1717 = vpop.f32.mrf.mxu0
        %1718 = vmatprep.mubr.f32.mxu0 0.0
        %1719 = vmatmul.mubr.f32.gmra.mxu0 %v1606
        %v1720 = vpop.f32.mrf.mxu0
        %v1721 = vadd.f32 0.0, %v1720
        %v1722 = vpop.f32.mrf.mxu0
        %1723 = vmatprep.mubr.f32.mxu0 0.0
        %1724 = vmatmul.mubr.f32.gmra.mxu0 %v1607
        %v1725 = vpop.f32.mrf.mxu0
        %v1726 = vadd.f32 0.0, %v1725
        %v1727 = vpop.f32.mrf.mxu0
        %1728 = vmatprep.mubr.f32.mxu0 0.0
        %1729 = vmatmul.mubr.f32.gmra.mxu0 %v1608
        %v1730 = vpop.f32.mrf.mxu0
        %v1731 = vadd.f32 0.0, %v1730
        %v1732 = vpop.f32.mrf.mxu0
        %1733 = vmatprep.mubr.f32.mxu0 0.0
        %1734 = vmatmul.mubr.f32.gmra.mxu0 %v1609
        %v1735 = vpop.f32.mrf.mxu0
        %v1736 = vadd.f32 0.0, %v1735
        %v1737 = vpop.f32.mrf.mxu0
        %1738 = vmatprep.mubr.f32.mxu0 0.0
        %1739 = vmatmul.mubr.f32.gmra.mxu0 %v1610
        %v1740 = vpop.f32.mrf.mxu0
        %v1741 = vadd.f32 0.0, %v1740
        %v1742 = vpop.f32.mrf.mxu0
        %1743 = vmatprep.mubr.f32.mxu0 0.0
        %1744 = vmatmul.mubr.f32.gmra.mxu0 %v1611
        %v1745 = vpop.f32.mrf.mxu0
        %v1746 = vadd.f32 0.0, %v1745
        %v1747 = vpop.f32.mrf.mxu0
        %1748 = vmatprep.mubr.f32.mxu0 0.0
        %1749 = vmatmul.mubr.f32.gmra.mxu0 %v1612
        %v1750 = vpop.f32.mrf.mxu0
        %v1751 = vadd.f32 0.0, %v1750
        %v1752 = vpop.f32.mrf.mxu0
        %1753 = vmatprep.mubr.f32.mxu0 0.0
        %1754 = vmatmul.mubr.f32.gmra.mxu0 %v1613
        %v1755 = vpop.f32.mrf.mxu0
        %v1756 = vadd.f32 0.0, %v1755
        %v1757 = vpop.f32.mrf.mxu0
        %1758 = vdwg.mxu0
        %v1759 = vmax.f32 %v1681, 0.0
        %v1760 = vmax.f32 %v1686, 0.0
        %v1761 = vmax.f32 %v1691, 0.0
        %v1762 = vmax.f32 %v1696, 0.0
        %v1763 = vmax.f32 %v1701, 0.0
        %v1764 = vmax.f32 %v1706, 0.0
        %v1765 = vmax.f32 %v1711, 0.0
        %v1766 = vmax.f32 %v1716, 0.0
        %v1767 = vmax.f32 %v1721, 0.0
        %v1768 = vmax.f32 %v1726, 0.0
        %v1769 = vmax.f32 %v1731, 0.0
        %v1770 = vmax.f32 %v1736, 0.0
        %v1771 = vmax.f32 %v1741, 0.0
        %v1772 = vmax.f32 %v1746, 0.0
        %v1773 = vmax.f32 %v1751, 0.0
        %v1774 = vmax.f32 %v1756, 0.0
        %v1775 = vld [vmem:[#allocation2 + $0x180] sm:$0xff]
        %v1776 = vld [vmem:[#allocation2 + $0x188] sm:$0xff]
        %v1777 = vld [vmem:[#allocation2 + $0x190] sm:$0xff]
        %v1778 = vld [vmem:[#allocation2 + $0x198] sm:$0xff]
        %v1779 = vld [vmem:[#allocation2 + $0x1a0] sm:$0xff]
        %v1780 = vld [vmem:[#allocation2 + $0x1a8] sm:$0xff]
        %v1781 = vld [vmem:[#allocation2 + $0x1b0] sm:$0xff]
        %v1782 = vld [vmem:[#allocation2 + $0x1b8] sm:$0xff]
        %v1783 = vld [vmem:[#allocation2 + $0x1c0] sm:$0xff]
        %v1784 = vld [vmem:[#allocation2 + $0x1c8] sm:$0xff]
        %v1785 = vld [vmem:[#allocation2 + $0x1d0] sm:$0xff]
        %v1786 = vld [vmem:[#allocation2 + $0x1d8] sm:$0xff]
        %v1787 = vld [vmem:[#allocation2 + $0x1e0] sm:$0xff]
        %v1788 = vld [vmem:[#allocation2 + $0x1e8] sm:$0xff]
        %v1789 = vld [vmem:[#allocation2 + $0x1f0] sm:$0xff]
        %v1790 = vld [vmem:[#allocation2 + $0x1f8] sm:$0xff]
        %1791 = vmatprep.subr.mxu0 0.0
        %1792 = vmatpush1.msra.mxu0 %v1790
        %1793 = vmatprep.subr.mxu0 0.0
        %1794 = vmatpush1.msra.mxu0 %v1789
        %1795 = vmatprep.subr.mxu0 0.0
        %1796 = vmatpush1.msra.mxu0 %v1788
        %1797 = vmatprep.subr.mxu0 0.0
        %1798 = vmatpush1.msra.mxu0 %v1787
        %1799 = vmatprep.subr.mxu0 0.0
        %1800 = vmatpush1.msra.mxu0 %v1786
        %1801 = vmatprep.subr.mxu0 0.0
        %1802 = vmatpush1.msra.mxu0 %v1785
        %1803 = vmatprep.subr.mxu0 0.0
        %1804 = vmatpush1.msra.mxu0 %v1784
        %1805 = vmatprep.subr.mxu0 0.0
        %1806 = vmatpush1.msra.mxu0 %v1783
        %1807 = vmatprep.subr.mxu0 0.0
        %1808 = vmatpush1.msra.mxu0 %v1782
        %1809 = vmatprep.subr.mxu0 0.0
        %1810 = vmatpush1.msra.mxu0 %v1781
        %1811 = vmatprep.subr.mxu0 0.0
        %1812 = vmatpush1.msra.mxu0 %v1780
        %1813 = vmatprep.subr.mxu0 0.0
        %1814 = vmatpush1.msra.mxu0 %v1779
        %1815 = vmatprep.subr.mxu0 0.0
        %1816 = vmatpush1.msra.mxu0 %v1778
        %1817 = vmatprep.subr.mxu0 0.0
        %1818 = vmatpush1.msra.mxu0 %v1777
        %1819 = vmatprep.subr.mxu0 0.0
        %1820 = vmatpush1.msra.mxu0 %v1776
        %1821 = vmatprep.subr.mxu0 0.0
        %1822 = vmatpush1.msra.mxu0 %v1775
        %1823 = vmatprep.subr.mxu0 0.0
        %1824 = vmatpush2.msra.mxu0 0.0
        %1825 = vmatprep.subr.mxu0 0.0
        %1826 = vmatpush2.msra.mxu0 0.0
        %1827 = vmatprep.subr.mxu0 0.0
        %1828 = vmatpush2.msra.mxu0 0.0
        %1829 = vmatprep.subr.mxu0 0.0
        %1830 = vmatpush2.msra.mxu0 0.0
        %1831 = vmatprep.subr.mxu0 0.0
        %1832 = vmatpush2.msra.mxu0 0.0
        %1833 = vmatprep.subr.mxu0 0.0
        %1834 = vmatpush2.msra.mxu0 0.0
        %1835 = vmatprep.subr.mxu0 0.0
        %1836 = vmatpush2.msra.mxu0 0.0
        %1837 = vmatprep.subr.mxu0 0.0
        %1838 = vmatpush2.msra.mxu0 0.0
        %1839 = vmatprep.subr.mxu0 0.0
        %1840 = vmatpush2.msra.mxu0 0.0
        %1841 = vmatprep.subr.mxu0 0.0
        %1842 = vmatpush2.msra.mxu0 0.0
        %1843 = vmatprep.subr.mxu0 0.0
        %1844 = vmatpush2.msra.mxu0 0.0
        %1845 = vmatprep.subr.mxu0 0.0
        %1846 = vmatpush2.msra.mxu0 0.0
        %1847 = vmatprep.subr.mxu0 0.0
        %1848 = vmatpush2.msra.mxu0 0.0
        %1849 = vmatprep.subr.mxu0 0.0
        %1850 = vmatpush2.msra.mxu0 0.0
        %1851 = vmatprep.subr.mxu0 0.0
        %1852 = vmatpush2.msra.mxu0 0.0
        %1853 = vmatprep.subr.mxu0 0.0
        %1854 = vmatpush2.msra.mxu0 0.0
        %1855 = vmatprep.mubr.f32.mxu0 0.0
        %1856 = vmatmul.mubr.f32.gmra.mxu0 %v1759
        %v1857 = vpop.f32.mrf.mxu0
        %v1858 = vadd.f32 0.0, %v1857
        %v1859 = vpop.f32.mrf.mxu0
        %1860 = vmatprep.mubr.f32.mxu0 0.0
        %1861 = vmatmul.mubr.f32.gmra.mxu0 %v1760
        %v1862 = vpop.f32.mrf.mxu0
        %v1863 = vadd.f32 0.0, %v1862
        %v1864 = vpop.f32.mrf.mxu0
        %1865 = vmatprep.mubr.f32.mxu0 0.0
        %1866 = vmatmul.mubr.f32.gmra.mxu0 %v1761
        %v1867 = vpop.f32.mrf.mxu0
        %v1868 = vadd.f32 0.0, %v1867
        %v1869 = vpop.f32.mrf.mxu0
        %1870 = vmatprep.mubr.f32.mxu0 0.0
        %1871 = vmatmul.mubr.f32.gmra.mxu0 %v1762
        %v1872 = vpop.f32.mrf.mxu0
        %v1873 = vadd.f32 0.0, %v1872
        %v1874 = vpop.f32.mrf.mxu0
        %1875 = vmatprep.mubr.f32.mxu0 0.0
        %1876 = vmatmul.mubr.f32.gmra.mxu0 %v1763
        %v1877 = vpop.f32.mrf.mxu0
        %v1878 = vadd.f32 0.0, %v1877
        %v1879 = vpop.f32.mrf.mxu0
        %1880 = vmatprep.mubr.f32.mxu0 0.0
        %1881 = vmatmul.mubr.f32.gmra.mxu0 %v1764
        %v1882 = vpop.f32.mrf.mxu0
        %v1883 = vadd.f32 0.0, %v1882
        %v1884 = vpop.f32.mrf.mxu0
        %1885 = vmatprep.mubr.f32.mxu0 0.0
        %1886 = vmatmul.mubr.f32.gmra.mxu0 %v1765
        %v1887 = vpop.f32.mrf.mxu0
        %v1888 = vadd.f32 0.0, %v1887
        %v1889 = vpop.f32.mrf.mxu0
        %1890 = vmatprep.mubr.f32.mxu0 0.0
        %1891 = vmatmul.mubr.f32.gmra.mxu0 %v1766
        %v1892 = vpop.f32.mrf.mxu0
        %v1893 = vadd.f32 0.0, %v1892
        %v1894 = vpop.f32.mrf.mxu0
        %1895 = vmatprep.mubr.f32.mxu0 0.0
        %1896 = vmatmul.mubr.f32.gmra.mxu0 %v1767
        %v1897 = vpop.f32.mrf.mxu0
        %v1898 = vadd.f32 0.0, %v1897
        %v1899 = vpop.f32.mrf.mxu0
        %1900 = vmatprep.mubr.f32.mxu0 0.0
        %1901 = vmatmul.mubr.f32.gmra.mxu0 %v1768
        %v1902 = vpop.f32.mrf.mxu0
        %v1903 = vadd.f32 0.0, %v1902
        %v1904 = vpop.f32.mrf.mxu0
        %1905 = vmatprep.mubr.f32.mxu0 0.0
        %1906 = vmatmul.mubr.f32.gmra.mxu0 %v1769
        %v1907 = vpop.f32.mrf.mxu0
        %v1908 = vadd.f32 0.0, %v1907
        %v1909 = vpop.f32.mrf.mxu0
        %1910 = vmatprep.mubr.f32.mxu0 0.0
        %1911 = vmatmul.mubr.f32.gmra.mxu0 %v1770
        %v1912 = vpop.f32.mrf.mxu0
        %v1913 = vadd.f32 0.0, %v1912
        %v1914 = vpop.f32.mrf.mxu0
        %1915 = vmatprep.mubr.f32.mxu0 0.0
        %1916 = vmatmul.mubr.f32.gmra.mxu0 %v1771
        %v1917 = vpop.f32.mrf.mxu0
        %v1918 = vadd.f32 0.0, %v1917
        %v1919 = vpop.f32.mrf.mxu0
        %1920 = vmatprep.mubr.f32.mxu0 0.0
        %1921 = vmatmul.mubr.f32.gmra.mxu0 %v1772
        %v1922 = vpop.f32.mrf.mxu0
        %v1923 = vadd.f32 0.0, %v1922
        %v1924 = vpop.f32.mrf.mxu0
        %1925 = vmatprep.mubr.f32.mxu0 0.0
        %1926 = vmatmul.mubr.f32.gmra.mxu0 %v1773
        %v1927 = vpop.f32.mrf.mxu0
        %v1928 = vadd.f32 0.0, %v1927
        %v1929 = vpop.f32.mrf.mxu0
        %1930 = vmatprep.mubr.f32.mxu0 0.0
        %1931 = vmatmul.mubr.f32.gmra.mxu0 %v1774
        %v1932 = vpop.f32.mrf.mxu0
        %v1933 = vadd.f32 0.0, %v1932
        %v1934 = vpop.f32.mrf.mxu0
        %1935 = vdwg.mxu0
        %v1936 = vadd.f32 %v1502, %v1858
        %v1937 = vadd.f32 %v1503, %v1863
        %v1938 = vadd.f32 %v1504, %v1868
        %v1939 = vadd.f32 %v1505, %v1873
        %v1940 = vadd.f32 %v1506, %v1878
        %v1941 = vadd.f32 %v1507, %v1883
        %v1942 = vadd.f32 %v1508, %v1888
        %v1943 = vadd.f32 %v1509, %v1893
        %v1944 = vadd.f32 %v1510, %v1898
        %v1945 = vadd.f32 %v1511, %v1903
        %v1946 = vadd.f32 %v1512, %v1908
        %v1947 = vadd.f32 %v1513, %v1913
        %v1948 = vadd.f32 %v1514, %v1918
        %v1949 = vadd.f32 %v1515, %v1923
        %v1950 = vadd.f32 %v1516, %v1928
        %v1951 = vadd.f32 %v1517, %v1933
        %v1952 = vld [vmem:[%s3] sm:$0x1]
        %v1954 = vlaneseq
        %v1955 = vshrl.u32 %v1954, 7
        %v1956 = vsub.s32 0, %v1955
        %v1957 = vrot.slane %v1952, %v1956
        %v1959 = vadd.f32 %v1936, %v1957
        %v1960 = vadd.f32 %v1937, %v1957
        %v1961 = vadd.f32 %v1938, %v1957
        %v1962 = vadd.f32 %v1939, %v1957
        %v1963 = vadd.f32 %v1940, %v1957
        %v1964 = vadd.f32 %v1941, %v1957
        %v1965 = vadd.f32 %v1942, %v1957
        %v1966 = vadd.f32 %v1943, %v1957
        %v1967 = vadd.f32 %v1944, %v1957
        %v1968 = vadd.f32 %v1945, %v1957
        %v1969 = vadd.f32 %v1946, %v1957
        %v1970 = vadd.f32 %v1947, %v1957
        %v1971 = vadd.f32 %v1948, %v1957
        %v1972 = vadd.f32 %v1949, %v1957
        %v1973 = vadd.f32 %v1950, %v1957
        %v1974 = vadd.f32 %v1951, %v1957
        %1975 = vmax.xlane.f32.xlu0 %v1959
        %v1976 = vpop.xlane.xlu0 %1975
        %1977 = vmax.xlane.f32.xlu0 %v1960
        %v1978 = vpop.xlane.xlu0 %1977
        %1979 = vmax.xlane.f32.xlu0 %v1961
        %v1980 = vpop.xlane.xlu0 %1979
        %1981 = vmax.xlane.f32.xlu0 %v1962
        %v1982 = vpop.xlane.xlu0 %1981
        %1983 = vmax.xlane.f32.xlu0 %v1963
        %v1984 = vpop.xlane.xlu0 %1983
        %1985 = vmax.xlane.f32.xlu0 %v1964
        %v1986 = vpop.xlane.xlu0 %1985
        %1987 = vmax.xlane.f32.xlu0 %v1965
        %v1988 = vpop.xlane.xlu0 %1987
        %1989 = vmax.xlane.f32.xlu0 %v1966
        %v1990 = vpop.xlane.xlu0 %1989
        %1991 = vmax.xlane.f32.xlu0 %v1967
        %v1992 = vpop.xlane.xlu0 %1991
        %1993 = vmax.xlane.f32.xlu0 %v1968
        %v1994 = vpop.xlane.xlu0 %1993
        %1995 = vmax.xlane.f32.xlu0 %v1969
        %v1996 = vpop.xlane.xlu0 %1995
        %1997 = vmax.xlane.f32.xlu0 %v1970
        %v1998 = vpop.xlane.xlu0 %1997
        %1999 = vmax.xlane.f32.xlu0 %v1971
        %v2000 = vpop.xlane.xlu0 %1999
        %2001 = vmax.xlane.f32.xlu0 %v1972
        %v2002 = vpop.xlane.xlu0 %2001
        %2003 = vmax.xlane.f32.xlu0 %v1973
        %v2004 = vpop.xlane.xlu0 %2003
        %2005 = vmax.xlane.f32.xlu0 %v1974
        %v2006 = vpop.xlane.xlu0 %2005
        %v2007 = vsub.f32 %v1959, %v1976
        %v2008 = vsub.f32 %v1960, %v1978
        %v2009 = vsub.f32 %v1961, %v1980
        %v2010 = vsub.f32 %v1962, %v1982
        %v2011 = vsub.f32 %v1963, %v1984
        %v2012 = vsub.f32 %v1964, %v1986
        %v2013 = vsub.f32 %v1965, %v1988
        %v2014 = vsub.f32 %v1966, %v1990
        %v2015 = vsub.f32 %v1967, %v1992
        %v2016 = vsub.f32 %v1968, %v1994
        %v2017 = vsub.f32 %v1969, %v1996
        %v2018 = vsub.f32 %v1970, %v1998
        %v2019 = vsub.f32 %v1971, %v2000
        %v2020 = vsub.f32 %v1972, %v2002
        %v2021 = vsub.f32 %v1973, %v2004
        %v2022 = vsub.f32 %v1974, %v2006
        %v2023 = vmul.f32 %v2007, 1.442695
        %v2024 = vpow.pop %v2023
        %v2025 = vmul.f32 %v2008, 1.442695
        %v2026 = vpow.pop %v2025
        %v2027 = vmul.f32 %v2009, 1.442695
        %v2028 = vpow.pop %v2027
        %v2029 = vmul.f32 %v2010, 1.442695
        %v2030 = vpow.pop %v2029
        %v2031 = vmul.f32 %v2011, 1.442695
        %v2032 = vpow.pop %v2031
        %v2033 = vmul.f32 %v2012, 1.442695
        %v2034 = vpow.pop %v2033
        %v2035 = vmul.f32 %v2013, 1.442695
        %v2036 = vpow.pop %v2035
        %v2037 = vmul.f32 %v2014, 1.442695
        %v2038 = vpow.pop %v2037
        %v2039 = vmul.f32 %v2015, 1.442695
        %v2040 = vpow.pop %v2039
        %v2041 = vmul.f32 %v2016, 1.442695
        %v2042 = vpow.pop %v2041
        %v2043 = vmul.f32 %v2017, 1.442695
        %v2044 = vpow.pop %v2043
        %v2045 = vmul.f32 %v2018, 1.442695
        %v2046 = vpow.pop %v2045
        %v2047 = vmul.f32 %v2019, 1.442695
        %v2048 = vpow.pop %v2047
        %v2049 = vmul.f32 %v2020, 1.442695
        %v2050 = vpow.pop %v2049
        %v2051 = vmul.f32 %v2021, 1.442695
        %v2052 = vpow.pop %v2051
        %v2053 = vmul.f32 %v2022, 1.442695
        %v2054 = vpow.pop %v2053
        %2055 = vadd.xlane.f32.xlu0 %v2024
        %v2056 = vpop.xlane.xlu0 %2055
        %2057 = vadd.xlane.f32.xlu0 %v2026
        %v2058 = vpop.xlane.xlu0 %2057
        %2059 = vadd.xlane.f32.xlu0 %v2028
        %v2060 = vpop.xlane.xlu0 %2059
        %2061 = vadd.xlane.f32.xlu0 %v2030
        %v2062 = vpop.xlane.xlu0 %2061
        %2063 = vadd.xlane.f32.xlu0 %v2032
        %v2064 = vpop.xlane.xlu0 %2063
        %2065 = vadd.xlane.f32.xlu0 %v2034
        %v2066 = vpop.xlane.xlu0 %2065
        %2067 = vadd.xlane.f32.xlu0 %v2036
        %v2068 = vpop.xlane.xlu0 %2067
        %2069 = vadd.xlane.f32.xlu0 %v2038
        %v2070 = vpop.xlane.xlu0 %2069
        %2071 = vadd.xlane.f32.xlu0 %v2040
        %v2072 = vpop.xlane.xlu0 %2071
        %2073 = vadd.xlane.f32.xlu0 %v2042
        %v2074 = vpop.xlane.xlu0 %2073
        %2075 = vadd.xlane.f32.xlu0 %v2044
        %v2076 = vpop.xlane.xlu0 %2075
        %2077 = vadd.xlane.f32.xlu0 %v2046
        %v2078 = vpop.xlane.xlu0 %2077
        %2079 = vadd.xlane.f32.xlu0 %v2048
        %v2080 = vpop.xlane.xlu0 %2079
        %2081 = vadd.xlane.f32.xlu0 %v2050
        %v2082 = vpop.xlane.xlu0 %2081
        %2083 = vadd.xlane.f32.xlu0 %v2052
        %v2084 = vpop.xlane.xlu0 %2083
        %2085 = vadd.xlane.f32.xlu0 %v2054
        %v2086 = vpop.xlane.xlu0 %2085
        %v2087 = vlog2.pop %v2056
        %v2088 = vmul.f32 %v2087, 0.6931472
        %v2089 = vlog2.pop %v2058
        %v2090 = vmul.f32 %v2089, 0.6931472
        %v2091 = vlog2.pop %v2060
        %v2092 = vmul.f32 %v2091, 0.6931472
        %v2093 = vlog2.pop %v2062
        %v2094 = vmul.f32 %v2093, 0.6931472
        %v2095 = vlog2.pop %v2064
        %v2096 = vmul.f32 %v2095, 0.6931472
        %v2097 = vlog2.pop %v2066
        %v2098 = vmul.f32 %v2097, 0.6931472
        %v2099 = vlog2.pop %v2068
        %v2100 = vmul.f32 %v2099, 0.6931472
        %v2101 = vlog2.pop %v2070
        %v2102 = vmul.f32 %v2101, 0.6931472
        %v2103 = vlog2.pop %v2072
        %v2104 = vmul.f32 %v2103, 0.6931472
        %v2105 = vlog2.pop %v2074
        %v2106 = vmul.f32 %v2105, 0.6931472
        %v2107 = vlog2.pop %v2076
        %v2108 = vmul.f32 %v2107, 0.6931472
        %v2109 = vlog2.pop %v2078
        %v2110 = vmul.f32 %v2109, 0.6931472
        %v2111 = vlog2.pop %v2080
        %v2112 = vmul.f32 %v2111, 0.6931472
        %v2113 = vlog2.pop %v2082
        %v2114 = vmul.f32 %v2113, 0.6931472
        %v2115 = vlog2.pop %v2084
        %v2116 = vmul.f32 %v2115, 0.6931472
        %v2117 = vlog2.pop %v2086
        %v2118 = vmul.f32 %v2117, 0.6931472
        %v2119 = vsub.f32 %v2007, %v2088
        %v2120 = vsub.f32 %v2008, %v2090
        %v2121 = vsub.f32 %v2009, %v2092
        %v2122 = vsub.f32 %v2010, %v2094
        %v2123 = vsub.f32 %v2011, %v2096
        %v2124 = vsub.f32 %v2012, %v2098
        %v2125 = vsub.f32 %v2013, %v2100
        %v2126 = vsub.f32 %v2014, %v2102
        %v2127 = vsub.f32 %v2015, %v2104
        %v2128 = vsub.f32 %v2016, %v2106
        %v2129 = vsub.f32 %v2017, %v2108
        %v2130 = vsub.f32 %v2018, %v2110
        %v2131 = vsub.f32 %v2019, %v2112
        %v2132 = vsub.f32 %v2020, %v2114
        %v2133 = vsub.f32 %v2021, %v2116
        %v2134 = vsub.f32 %v2022, %v2118
        %2135 = vst [vmem:[%s206] sm:$0xff] %v2119
        %2136 = vst [vmem:[%s206 + $0x8] sm:$0xff] %v2120
        %2137 = vst [vmem:[%s206 + $0x10] sm:$0xff] %v2121
        %2138 = vst [vmem:[%s206 + $0x18] sm:$0xff] %v2122
        %2139 = vst [vmem:[%s206 + $0x20] sm:$0xff] %v2123
        %2140 = vst [vmem:[%s206 + $0x28] sm:$0xff] %v2124
        %2141 = vst [vmem:[%s206 + $0x30] sm:$0xff] %v2125
        %2142 = vst [vmem:[%s206 + $0x38] sm:$0xff] %v2126
        %2143 = vst [vmem:[%s206 + $0x40] sm:$0xff] %v2127
        %2144 = vst [vmem:[%s206 + $0x48] sm:$0xff] %v2128
        %2145 = vst [vmem:[%s206 + $0x50] sm:$0xff] %v2129
        %2146 = vst [vmem:[%s206 + $0x58] sm:$0xff] %v2130
        %2147 = vst [vmem:[%s206 + $0x60] sm:$0xff] %v2131
        %2148 = vst [vmem:[%s206 + $0x68] sm:$0xff] %v2132
        %2149 = vst [vmem:[%s206 + $0x70] sm:$0xff] %v2133
        %2150 = vst [vmem:[%s206 + $0x78] sm:$0xff] %v2134
        %s2151 = sand.u32 %s116, 1
        %s2152 = scalar_lea.sflag [#allocation4], %s2151
        %s2153 = sand.u32 %s116, 1
        %s2154 = smul.addr %s2153, 128
        %s2155 = scalar_lea.vmem [#allocation5], %s2154
        // Predicated region
        $region41: #{tpu_custom_call.1} parent=35 // pred_check
          %p2156 = pneg %p126
        $region42: #{tpu_custom_call.1} parent=35 // pred_check_branch
          %2158 = sbr.rel (%p2156) target = $region44
        $region43: #{tpu_custom_call.1} parent=35 // pred_region
          %s2159 = smul.u32 16, %s19
          %s2161 = ssub.s32 2048, 2048
          %2162 = vsyncadd %s2152, %s2161
          %s2163 = smul.addr %s2159, 128
          %s2164 = scalar_lea.hbm %s4, %s2163
          %s2165 = sshll.u32 %s2155, 4
          %s2166 = int_to_ptr.vmem [resolvable:$true] %s2165
          %2171 = dma.vmem_to_hbm [thread:$0]  %s2166, 2048, %s2164, %s2152, 128, 128, 8
        $region44: #{tpu_custom_call.1} parent=35 // pred_fallthru
          _
      $region36: #{tpu_custom_call.1} parent=5 // pred_fallthru
        _
      %p2172 = scmp.le.s32.totalorder 2, %s14
      // Predicated region
      $region45: #{tpu_custom_call.1} parent=5 // pred_check
        %p2173 = pneg %p2172
      $region46: #{tpu_custom_call.1} parent=5 // pred_check_branch
        %2175 = sbr.rel (%p2173) target = $region48
      $region47: #{tpu_custom_call.1} parent=5 // pred_region
        %s2176 = ssub.s32 %s14, 2
        // Predicated region
        $region49: #{tpu_custom_call.1} parent=47 // pred_check
          %p2177 = pneg %p132
        $region50: #{tpu_custom_call.1} parent=47 // pred_check_branch
          %2179 = sbr.rel (%p2177) target = $region52
        $region51: #{tpu_custom_call.1} parent=47 // pred_region
          %s2180 = sand.u32 %s117, 1
          %s2181 = scalar_lea.sflag [#allocation4], %s2180
          %s2182 = sand.u32 %s117, 1
          %s2183 = smul.addr %s2182, 128
          %s2184 = scalar_lea.vmem [#allocation5], %s2183
          %2185 = dma.done %s2181, 2048
        $region52: #{tpu_custom_call.1} parent=47 // pred_fallthru
          _
      $region48: #{tpu_custom_call.1} parent=5 // pred_fallthru
        _
    $region6: #{tpu_custom_call.1} parent=1 // loop_footer
      %s18 = sadd.s32 1, %s14
    $region7: #{tpu_custom_call.1} parent=1 // loop_footer_branch
      %13 = sbr.rel target = $region3
    $region8: #{tpu_custom_call.1} parent=1 // loop_exit
      _
    %2186 = vsyncpa [#allocation3], 1
    %s2187 = scalar_lea.sflag [#allocation3], 1
    %2188 = vsyncpa %s2187, 1
    %2189 = vsyncpa [#allocation4], 1
    %s2190 = scalar_lea.sflag [#allocation4], 1
    %2191 = vsyncpa %s2190, 1

</llo_original>
